<compile_context>
chip_gen: v5e
topology: v5e:2x2
jax: 0.10.0
libtpu: 0.0.40
codegen_flags: <defaults>
</compile_context>

<pallas_src>
import functools

import jax
import jax.numpy as jnp
from jax.experimental import pallas as pl
from jax.experimental.pallas import tpu as pltpu

XI = 10.0
EPS = 1.0
IP = 2
TEMP = 1.0


# ------------------------------ fused kernel -------------------------------- #

def _fused_vat_kernel(wf_ref, bt_ref, x_ref, d_ref, pred_ref, o_ref,
                      *, xi, eps, ip, grad_scale):
    """Fully fused VAT direction generator for ONE batch sample.

    Refs (batch dim squeezed):
      wf_ref : SMEM (K, C)  = W / temp
      bt_ref : SMEM (K,)    = b / temp
      x_ref, d_ref, o_ref : VMEM (C, P)   (P = H*W on lanes)
      pred_ref            : VMEM (K, P)
    """
    C, P = x_ref.shape
    K = pred_ref.shape[0]

    # Scalar weights from SMEM, read once per grid step.
    w_s = [[wf_ref[k, c] for c in range(C)] for k in range(K)]       # W / temp
    wxi_s = [[xi * w_s[k][c] for c in range(C)] for k in range(K)]   # xi * W / temp
    b_s = [bt_ref[k] for k in range(K)]                              # b / temp

    # Lane-dense rows (each (1, P)).
    x_rows = [x_ref[c:c + 1, :] for c in range(C)]
    p_rows = [pred_ref[k:k + 1, :] for k in range(K)]

    # ---- d = _l2_normalize(d0): per-sample L2 norm over all elements ----
    d_rows = [d_ref[c:c + 1, :] for c in range(C)]
    ss0 = jnp.sum(d_rows[0] * d_rows[0])
    for c in range(1, C):
        ss0 = ss0 + jnp.sum(d_rows[c] * d_rows[c])
    inv0 = 1.0 / (jnp.sqrt(ss0) + 1e-8)
    d_rows = [dr * inv0 for dr in d_rows]

    # ---- iteration-invariant clean logits: (W @ x + b) / temp ----
    base_rows = []
    for k in range(K):
        acc = w_s[k][0] * x_rows[0] + b_s[k]
        for c in range(1, C):
            acc = acc + w_s[k][c] * x_rows[c]
        base_rows.append(acc)                                        # (1, P)

    # ---- ip power iterations, fully unrolled in-kernel ----
    for _ in range(ip):
        # forward: logits/temp for x + xi*d  (unrolled VPU FMAs, no MXU)
        l_rows = []
        for k in range(K):
            acc = base_rows[k]
            for c in range(C):
                acc = acc + wxi_s[k][c] * d_rows[c]
            l_rows.append(acc)                                       # (1, P)

        # numerically-stable softmax over the K classes (pure VPU/EUP)
        m = l_rows[0]
        for k in range(1, K):
            m = jnp.maximum(m, l_rows[k])
        e_rows = [jnp.exp(lr - m) for lr in l_rows]
        denom = e_rows[0]
        for k in range(1, K):
            denom = denom + e_rows[k]
        inv_denom = 1.0 / denom                                      # one divide / pixel
        # g = softmax - pred  (unscaled d KL(pred || p_hat) / d logits)
        g_rows = [e_rows[k] * inv_denom - p_rows[k] for k in range(K)]

        # backward: grad[c] = sum_k (W/temp)[k, c] * g[k]  (unscaled)
        gr_rows = []
        for c in range(C):
            acc = w_s[0][c] * g_rows[0]
            for k in range(1, K):
                acc = acc + w_s[k][c] * g_rows[k]
            gr_rows.append(acc)                                      # (1, P)

        # d = _l2_normalize(grad_scale * grad) — exact, incl. the 1e-8 epsilon.
        ss = jnp.sum(gr_rows[0] * gr_rows[0])
        for c in range(1, C):
            ss = ss + jnp.sum(gr_rows[c] * gr_rows[c])
        inv = grad_scale / (grad_scale * jnp.sqrt(ss) + 1e-8)
        d_rows = [gr * inv for gr in gr_rows]

    # ---- output: x + eps * d (full-lane-width stores) ----
    for c in range(C):
        o_ref[c:c + 1, :] = x_rows[c] + eps * d_rows[c]


# -------------------------------- wrapper ------------------------------------ #

def generate_ad(x_nchw, pred_nkhw, w, b, d0_nchw,
                *, xi=XI, eps=EPS, ip=IP, temp=TEMP):
    """JAX/Pallas equivalent of generateAD.forward(model, x, pred, mode='cat')."""
    N, C, H, W_ = x_nchw.shape
    K = pred_nkhw.shape[1]
    P = H * W_

    # NCHW -> (N, C, P) is a pure reshape: no HBM transpose round trip.
    x = x_nchw.reshape(N, C, P).astype(jnp.float32)
    pred = pred_nkhw.reshape(N, K, P).astype(jnp.float32)
    d0 = d0_nchw.reshape(N, C, P).astype(jnp.float32)

    wf = (w / temp).astype(jnp.float32)              # (K, C), temp folded in
    bt = (b / temp).astype(jnp.float32)              # (K,)
    grad_scale = float(xi) / float(N * P)            # 1/temp already lives in wf

    kernel = functools.partial(_fused_vat_kernel, xi=float(xi), eps=float(eps),
                               ip=int(ip), grad_scale=grad_scale)
    sample_c = pl.BlockSpec((None, C, P), lambda n: (n, 0, 0))
    sample_k = pl.BlockSpec((None, K, P), lambda n: (n, 0, 0))

    out = pl.pallas_call(
        kernel,
        out_shape=jax.ShapeDtypeStruct((N, C, P), jnp.float32),
        grid=(N,),
        in_specs=[
            pl.BlockSpec(memory_space=pltpu.MemorySpace.SMEM),   # W/temp scalars
            pl.BlockSpec(memory_space=pltpu.MemorySpace.SMEM),   # b/temp scalars
            sample_c,                                            # x
            sample_c,                                            # d0
            sample_k,                                            # pred
        ],
        out_specs=sample_c,
        compiler_params=pltpu.CompilerParams(
            dimension_semantics=("parallel",)),                  # 2 TCs on v7x
    )(wf, bt, x, d0, pred)

    return out.reshape(N, C, H, W_)


# --------------------------- pure-JAX reference ------------------------------ #

def _ref_generate_ad(x_nchw, pred_nkhw, w, b, d0_nchw,
                     *, xi=XI, eps=EPS, ip=IP, temp=TEMP):
    N, C, H, W_ = x_nchw.shape
    K = pred_nkhw.shape[1]
    P = H * W_
    x = x_nchw.reshape(N, C, P)
    pred = pred_nkhw.reshape(N, K, P)
    d = d0_nchw.reshape(N, C, P)

    def l2n(v):
        n = jnp.sqrt(jnp.sum(v * v, axis=(1, 2), keepdims=True))
        return v / (n + 1e-8)

    def loss_fn(dd):
        z = x + xi * dd
        logits = jnp.einsum('ncp,kc->nkp', z, w) + b[None, :, None]
        logp = jax.nn.log_softmax(logits / temp, axis=1)
        kl = jnp.sum(pred * (jnp.log(pred + 1e-16) - logp), axis=1)
        return jnp.mean(kl)

    d = l2n(d)
    for _ in range(ip):
        d = l2n(jax.grad(loss_fn)(d))
    out = x + eps * d
    return out.reshape(N, C, H, W_)


# ---------------------------------- main -------------------------------------- #

if __name__ == "__main__":
    key = jax.random.PRNGKey(0)
    k_x, k_w, k_b, k_d = jax.random.split(key, 4)

    N, C, H, W = 2, 4, 16, 16      # batch, input channels, spatial
    K = 4                          # number of segmentation classes

    x = jax.random.normal(k_x, (N, C, H, W), dtype=jnp.float32)
    # deterministic "model": 1x1 conv (K, C) + bias (K,)
    w = 0.1 * jax.random.normal(k_w, (K, C), dtype=jnp.float32)
    b = 0.01 * jax.random.normal(k_b, (K,), dtype=jnp.float32)
    # pred (the module's `pred` input): simplex output of the model on clean x
    logits = jnp.einsum('nchw,kc->nkhw', x, w) + b[None, :, None, None]
    pred = jax.nn.softmax(logits / TEMP, axis=1)
    # d = torch.randn_like(x)
    d0 = jax.random.normal(k_d, (N, C, H, W), dtype=jnp.float32)

    out = jax.block_until_ready(generate_ad(x, pred, w, b, d0))
    ref = jax.block_until_ready(_ref_generate_ad(x, pred, w, b, d0))

    assert out.shape == x.shape and out.dtype == jnp.float32
    assert jnp.allclose(out, ref, rtol=1e-4, atol=1e-4), "mismatch vs reference"

    print("KERNEL_OK")
</pallas_src>

<mosaic_0001>
module attributes {stable_mosaic.version = 11 : i64} {
  func.func @_fused_vat_kernel(%arg0: i32, %arg1: memref<4x4xf32, #tpu.memory_space<smem>>, %arg2: memref<4xf32, #tpu.memory_space<smem>>, %arg3: memref<1x4x256xf32, #tpu.memory_space<vmem>>, %arg4: memref<1x4x256xf32, #tpu.memory_space<vmem>>, %arg5: memref<1x4x256xf32, #tpu.memory_space<vmem>>, %arg6: memref<1x4x256xf32, #tpu.memory_space<vmem>>) attributes {dimension_semantics = [#tpu.dimension_semantics<parallel>], iteration_bounds = array<i64: 2>, scalar_prefetch = 0 : i64, scratch_operands = 0 : i64, tpu.core_type = #tpu.core_type<tc>, window_params = [{transform_indices = @transform_0, window_bounds = array<i64: 4, 4>}, {transform_indices = @transform_1, window_bounds = array<i64: 4>}, {transform_indices = @transform_2, window_bounds = array<i64: 1, 4, 256>}, {transform_indices = @transform_3, window_bounds = array<i64: 1, 4, 256>}, {transform_indices = @transform_4, window_bounds = array<i64: 1, 4, 256>}, {transform_indices = @transform_5, window_bounds = array<i64: 1, 4, 256>}]} {
    %c0 = arith.constant 0 : index
    %c0_0 = arith.constant 0 : index
    %0 = memref.load %arg1[%c0, %c0_0] : memref<4x4xf32, #tpu.memory_space<smem>>
    %c0_1 = arith.constant 0 : index
    %c1 = arith.constant 1 : index
    %1 = memref.load %arg1[%c0_1, %c1] : memref<4x4xf32, #tpu.memory_space<smem>>
    %c0_2 = arith.constant 0 : index
    %c2 = arith.constant 2 : index
    %2 = memref.load %arg1[%c0_2, %c2] : memref<4x4xf32, #tpu.memory_space<smem>>
    %c0_3 = arith.constant 0 : index
    %c3 = arith.constant 3 : index
    %3 = memref.load %arg1[%c0_3, %c3] : memref<4x4xf32, #tpu.memory_space<smem>>
    %c1_4 = arith.constant 1 : index
    %c0_5 = arith.constant 0 : index
    %4 = memref.load %arg1[%c1_4, %c0_5] : memref<4x4xf32, #tpu.memory_space<smem>>
    %c1_6 = arith.constant 1 : index
    %c1_7 = arith.constant 1 : index
    %5 = memref.load %arg1[%c1_6, %c1_7] : memref<4x4xf32, #tpu.memory_space<smem>>
    %c1_8 = arith.constant 1 : index
    %c2_9 = arith.constant 2 : index
    %6 = memref.load %arg1[%c1_8, %c2_9] : memref<4x4xf32, #tpu.memory_space<smem>>
    %c1_10 = arith.constant 1 : index
    %c3_11 = arith.constant 3 : index
    %7 = memref.load %arg1[%c1_10, %c3_11] : memref<4x4xf32, #tpu.memory_space<smem>>
    %c2_12 = arith.constant 2 : index
    %c0_13 = arith.constant 0 : index
    %8 = memref.load %arg1[%c2_12, %c0_13] : memref<4x4xf32, #tpu.memory_space<smem>>
    %c2_14 = arith.constant 2 : index
    %c1_15 = arith.constant 1 : index
    %9 = memref.load %arg1[%c2_14, %c1_15] : memref<4x4xf32, #tpu.memory_space<smem>>
    %c2_16 = arith.constant 2 : index
    %c2_17 = arith.constant 2 : index
    %10 = memref.load %arg1[%c2_16, %c2_17] : memref<4x4xf32, #tpu.memory_space<smem>>
    %c2_18 = arith.constant 2 : index
    %c3_19 = arith.constant 3 : index
    %11 = memref.load %arg1[%c2_18, %c3_19] : memref<4x4xf32, #tpu.memory_space<smem>>
    %c3_20 = arith.constant 3 : index
    %c0_21 = arith.constant 0 : index
    %12 = memref.load %arg1[%c3_20, %c0_21] : memref<4x4xf32, #tpu.memory_space<smem>>
    %c3_22 = arith.constant 3 : index
    %c1_23 = arith.constant 1 : index
    %13 = memref.load %arg1[%c3_22, %c1_23] : memref<4x4xf32, #tpu.memory_space<smem>>
    %c3_24 = arith.constant 3 : index
    %c2_25 = arith.constant 2 : index
    %14 = memref.load %arg1[%c3_24, %c2_25] : memref<4x4xf32, #tpu.memory_space<smem>>
    %c3_26 = arith.constant 3 : index
    %c3_27 = arith.constant 3 : index
    %15 = memref.load %arg1[%c3_26, %c3_27] : memref<4x4xf32, #tpu.memory_space<smem>>
    %cst = arith.constant 1.000000e+01 : f32
    %16 = arith.mulf %cst, %0 : f32
    %cst_28 = arith.constant 1.000000e+01 : f32
    %17 = arith.mulf %cst_28, %1 : f32
    %cst_29 = arith.constant 1.000000e+01 : f32
    %18 = arith.mulf %cst_29, %2 : f32
    %cst_30 = arith.constant 1.000000e+01 : f32
    %19 = arith.mulf %cst_30, %3 : f32
    %cst_31 = arith.constant 1.000000e+01 : f32
    %20 = arith.mulf %cst_31, %4 : f32
    %cst_32 = arith.constant 1.000000e+01 : f32
    %21 = arith.mulf %cst_32, %5 : f32
    %cst_33 = arith.constant 1.000000e+01 : f32
    %22 = arith.mulf %cst_33, %6 : f32
    %cst_34 = arith.constant 1.000000e+01 : f32
    %23 = arith.mulf %cst_34, %7 : f32
    %cst_35 = arith.constant 1.000000e+01 : f32
    %24 = arith.mulf %cst_35, %8 : f32
    %cst_36 = arith.constant 1.000000e+01 : f32
    %25 = arith.mulf %cst_36, %9 : f32
    %cst_37 = arith.constant 1.000000e+01 : f32
    %26 = arith.mulf %cst_37, %10 : f32
    %cst_38 = arith.constant 1.000000e+01 : f32
    %27 = arith.mulf %cst_38, %11 : f32
    %cst_39 = arith.constant 1.000000e+01 : f32
    %28 = arith.mulf %cst_39, %12 : f32
    %cst_40 = arith.constant 1.000000e+01 : f32
    %29 = arith.mulf %cst_40, %13 : f32
    %cst_41 = arith.constant 1.000000e+01 : f32
    %30 = arith.mulf %cst_41, %14 : f32
    %cst_42 = arith.constant 1.000000e+01 : f32
    %31 = arith.mulf %cst_42, %15 : f32
    %c0_43 = arith.constant 0 : index
    %32 = memref.load %arg2[%c0_43] : memref<4xf32, #tpu.memory_space<smem>>
    %c1_44 = arith.constant 1 : index
    %33 = memref.load %arg2[%c1_44] : memref<4xf32, #tpu.memory_space<smem>>
    %c2_45 = arith.constant 2 : index
    %34 = memref.load %arg2[%c2_45] : memref<4xf32, #tpu.memory_space<smem>>
    %c3_46 = arith.constant 3 : index
    %35 = memref.load %arg2[%c3_46] : memref<4xf32, #tpu.memory_space<smem>>
    %c0_47 = arith.constant 0 : index
    %c0_48 = arith.constant 0 : index
    %c0_49 = arith.constant 0 : index
    %36 = vector.load %arg3[%c0_47, %c0_48, %c0_49] : memref<1x4x256xf32, #tpu.memory_space<vmem>>, vector<1x1x256xf32>
    %37 = vector.shape_cast %36 : vector<1x1x256xf32> to vector<1x256xf32>
    %c0_50 = arith.constant 0 : index
    %c1_51 = arith.constant 1 : index
    %c0_52 = arith.constant 0 : index
    %38 = vector.load %arg3[%c0_50, %c1_51, %c0_52] : memref<1x4x256xf32, #tpu.memory_space<vmem>>, vector<1x1x256xf32>
    %39 = vector.shape_cast %38 : vector<1x1x256xf32> to vector<1x256xf32>
    %c0_53 = arith.constant 0 : index
    %c2_54 = arith.constant 2 : index
    %c0_55 = arith.constant 0 : index
    %40 = vector.load %arg3[%c0_53, %c2_54, %c0_55] : memref<1x4x256xf32, #tpu.memory_space<vmem>>, vector<1x1x256xf32>
    %41 = vector.shape_cast %40 : vector<1x1x256xf32> to vector<1x256xf32>
    %c0_56 = arith.constant 0 : index
    %c3_57 = arith.constant 3 : index
    %c0_58 = arith.constant 0 : index
    %42 = vector.load %arg3[%c0_56, %c3_57, %c0_58] : memref<1x4x256xf32, #tpu.memory_space<vmem>>, vector<1x1x256xf32>
    %43 = vector.shape_cast %42 : vector<1x1x256xf32> to vector<1x256xf32>
    %c0_59 = arith.constant 0 : index
    %c0_60 = arith.constant 0 : index
    %c0_61 = arith.constant 0 : index
    %44 = vector.load %arg5[%c0_59, %c0_60, %c0_61] : memref<1x4x256xf32, #tpu.memory_space<vmem>>, vector<1x1x256xf32>
    %45 = vector.shape_cast %44 : vector<1x1x256xf32> to vector<1x256xf32>
    %c0_62 = arith.constant 0 : index
    %c1_63 = arith.constant 1 : index
    %c0_64 = arith.constant 0 : index
    %46 = vector.load %arg5[%c0_62, %c1_63, %c0_64] : memref<1x4x256xf32, #tpu.memory_space<vmem>>, vector<1x1x256xf32>
    %47 = vector.shape_cast %46 : vector<1x1x256xf32> to vector<1x256xf32>
    %c0_65 = arith.constant 0 : index
    %c2_66 = arith.constant 2 : index
    %c0_67 = arith.constant 0 : index
    %48 = vector.load %arg5[%c0_65, %c2_66, %c0_67] : memref<1x4x256xf32, #tpu.memory_space<vmem>>, vector<1x1x256xf32>
    %49 = vector.shape_cast %48 : vector<1x1x256xf32> to vector<1x256xf32>
    %c0_68 = arith.constant 0 : index
    %c3_69 = arith.constant 3 : index
    %c0_70 = arith.constant 0 : index
    %50 = vector.load %arg5[%c0_68, %c3_69, %c0_70] : memref<1x4x256xf32, #tpu.memory_space<vmem>>, vector<1x1x256xf32>
    %51 = vector.shape_cast %50 : vector<1x1x256xf32> to vector<1x256xf32>
    %c0_71 = arith.constant 0 : index
    %c0_72 = arith.constant 0 : index
    %c0_73 = arith.constant 0 : index
    %52 = vector.load %arg4[%c0_71, %c0_72, %c0_73] : memref<1x4x256xf32, #tpu.memory_space<vmem>>, vector<1x1x256xf32>
    %53 = vector.shape_cast %52 : vector<1x1x256xf32> to vector<1x256xf32>
    %c0_74 = arith.constant 0 : index
    %c1_75 = arith.constant 1 : index
    %c0_76 = arith.constant 0 : index
    %54 = vector.load %arg4[%c0_74, %c1_75, %c0_76] : memref<1x4x256xf32, #tpu.memory_space<vmem>>, vector<1x1x256xf32>
    %55 = vector.shape_cast %54 : vector<1x1x256xf32> to vector<1x256xf32>
    %c0_77 = arith.constant 0 : index
    %c2_78 = arith.constant 2 : index
    %c0_79 = arith.constant 0 : index
    %56 = vector.load %arg4[%c0_77, %c2_78, %c0_79] : memref<1x4x256xf32, #tpu.memory_space<vmem>>, vector<1x1x256xf32>
    %57 = vector.shape_cast %56 : vector<1x1x256xf32> to vector<1x256xf32>
    %c0_80 = arith.constant 0 : index
    %c3_81 = arith.constant 3 : index
    %c0_82 = arith.constant 0 : index
    %58 = vector.load %arg4[%c0_80, %c3_81, %c0_82] : memref<1x4x256xf32, #tpu.memory_space<vmem>>, vector<1x1x256xf32>
    %59 = vector.shape_cast %58 : vector<1x1x256xf32> to vector<1x256xf32>
    %60 = arith.mulf %53, %53 : vector<1x256xf32>
    %61 = vector.shape_cast %60 : vector<1x256xf32> to vector<1x1x256xf32>
    %cst_83 = arith.constant dense<0.000000e+00> : vector<1xf32>
    %62 = vector.multi_reduction <add>, %61, %cst_83 [1, 2] : vector<1x1x256xf32> to vector<1xf32>
    %63 = vector.shape_cast %62 : vector<1xf32> to vector<1x1x1xf32>
    %64 = vector.extract %63[0, 0, 0] : f32 from vector<1x1x1xf32>
    %65 = arith.mulf %55, %55 : vector<1x256xf32>
    %66 = vector.shape_cast %65 : vector<1x256xf32> to vector<1x1x256xf32>
    %cst_84 = arith.constant dense<0.000000e+00> : vector<1xf32>
    %67 = vector.multi_reduction <add>, %66, %cst_84 [1, 2] : vector<1x1x256xf32> to vector<1xf32>
    %68 = vector.shape_cast %67 : vector<1xf32> to vector<1x1x1xf32>
    %69 = vector.extract %68[0, 0, 0] : f32 from vector<1x1x1xf32>
    %70 = arith.addf %64, %69 : f32
    %71 = arith.mulf %57, %57 : vector<1x256xf32>
    %72 = vector.shape_cast %71 : vector<1x256xf32> to vector<1x1x256xf32>
    %cst_85 = arith.constant dense<0.000000e+00> : vector<1xf32>
    %73 = vector.multi_reduction <add>, %72, %cst_85 [1, 2] : vector<1x1x256xf32> to vector<1xf32>
    %74 = vector.shape_cast %73 : vector<1xf32> to vector<1x1x1xf32>
    %75 = vector.extract %74[0, 0, 0] : f32 from vector<1x1x1xf32>
    %76 = arith.addf %70, %75 : f32
    %77 = arith.mulf %59, %59 : vector<1x256xf32>
    %78 = vector.shape_cast %77 : vector<1x256xf32> to vector<1x1x256xf32>
    %cst_86 = arith.constant dense<0.000000e+00> : vector<1xf32>
    %79 = vector.multi_reduction <add>, %78, %cst_86 [1, 2] : vector<1x1x256xf32> to vector<1xf32>
    %80 = vector.shape_cast %79 : vector<1xf32> to vector<1x1x1xf32>
    %81 = vector.extract %80[0, 0, 0] : f32 from vector<1x1x1xf32>
    %82 = arith.addf %76, %81 : f32
    %83 = math.sqrt %82 : f32
    %cst_87 = arith.constant 9.99999993E-9 : f32
    %84 = arith.addf %83, %cst_87 : f32
    %cst_88 = arith.constant 1.000000e+00 : f32
    %85 = arith.divf %cst_88, %84 : f32
    %86 = vector.broadcast %85 : f32 to vector<1x256xf32>
    %87 = arith.mulf %53, %86 : vector<1x256xf32>
    %88 = vector.broadcast %85 : f32 to vector<1x256xf32>
    %89 = arith.mulf %55, %88 : vector<1x256xf32>
    %90 = vector.broadcast %85 : f32 to vector<1x256xf32>
    %91 = arith.mulf %57, %90 : vector<1x256xf32>
    %92 = vector.broadcast %85 : f32 to vector<1x256xf32>
    %93 = arith.mulf %59, %92 : vector<1x256xf32>
    %94 = vector.broadcast %0 : f32 to vector<1x256xf32>
    %95 = arith.mulf %94, %37 : vector<1x256xf32>
    %96 = vector.broadcast %32 : f32 to vector<1x256xf32>
    %97 = arith.addf %95, %96 : vector<1x256xf32>
    %98 = vector.broadcast %1 : f32 to vector<1x256xf32>
    %99 = arith.mulf %98, %39 : vector<1x256xf32>
    %100 = arith.addf %97, %99 : vector<1x256xf32>
    %101 = vector.broadcast %2 : f32 to vector<1x256xf32>
    %102 = arith.mulf %101, %41 : vector<1x256xf32>
    %103 = arith.addf %100, %102 : vector<1x256xf32>
    %104 = vector.broadcast %3 : f32 to vector<1x256xf32>
    %105 = arith.mulf %104, %43 : vector<1x256xf32>
    %106 = arith.addf %103, %105 : vector<1x256xf32>
    %107 = vector.broadcast %4 : f32 to vector<1x256xf32>
    %108 = arith.mulf %107, %37 : vector<1x256xf32>
    %109 = vector.broadcast %33 : f32 to vector<1x256xf32>
    %110 = arith.addf %108, %109 : vector<1x256xf32>
    %111 = vector.broadcast %5 : f32 to vector<1x256xf32>
    %112 = arith.mulf %111, %39 : vector<1x256xf32>
    %113 = arith.addf %110, %112 : vector<1x256xf32>
    %114 = vector.broadcast %6 : f32 to vector<1x256xf32>
    %115 = arith.mulf %114, %41 : vector<1x256xf32>
    %116 = arith.addf %113, %115 : vector<1x256xf32>
    %117 = vector.broadcast %7 : f32 to vector<1x256xf32>
    %118 = arith.mulf %117, %43 : vector<1x256xf32>
    %119 = arith.addf %116, %118 : vector<1x256xf32>
    %120 = vector.broadcast %8 : f32 to vector<1x256xf32>
    %121 = arith.mulf %120, %37 : vector<1x256xf32>
    %122 = vector.broadcast %34 : f32 to vector<1x256xf32>
    %123 = arith.addf %121, %122 : vector<1x256xf32>
    %124 = vector.broadcast %9 : f32 to vector<1x256xf32>
    %125 = arith.mulf %124, %39 : vector<1x256xf32>
    %126 = arith.addf %123, %125 : vector<1x256xf32>
    %127 = vector.broadcast %10 : f32 to vector<1x256xf32>
    %128 = arith.mulf %127, %41 : vector<1x256xf32>
    %129 = arith.addf %126, %128 : vector<1x256xf32>
    %130 = vector.broadcast %11 : f32 to vector<1x256xf32>
    %131 = arith.mulf %130, %43 : vector<1x256xf32>
    %132 = arith.addf %129, %131 : vector<1x256xf32>
    %133 = vector.broadcast %12 : f32 to vector<1x256xf32>
    %134 = arith.mulf %133, %37 : vector<1x256xf32>
    %135 = vector.broadcast %35 : f32 to vector<1x256xf32>
    %136 = arith.addf %134, %135 : vector<1x256xf32>
    %137 = vector.broadcast %13 : f32 to vector<1x256xf32>
    %138 = arith.mulf %137, %39 : vector<1x256xf32>
    %139 = arith.addf %136, %138 : vector<1x256xf32>
    %140 = vector.broadcast %14 : f32 to vector<1x256xf32>
    %141 = arith.mulf %140, %41 : vector<1x256xf32>
    %142 = arith.addf %139, %141 : vector<1x256xf32>
    %143 = vector.broadcast %15 : f32 to vector<1x256xf32>
    %144 = arith.mulf %143, %43 : vector<1x256xf32>
    %145 = arith.addf %142, %144 : vector<1x256xf32>
    %146 = vector.broadcast %16 : f32 to vector<1x256xf32>
    %147 = arith.mulf %146, %87 : vector<1x256xf32>
    %148 = arith.addf %106, %147 : vector<1x256xf32>
    %149 = vector.broadcast %17 : f32 to vector<1x256xf32>
    %150 = arith.mulf %149, %89 : vector<1x256xf32>
    %151 = arith.addf %148, %150 : vector<1x256xf32>
    %152 = vector.broadcast %18 : f32 to vector<1x256xf32>
    %153 = arith.mulf %152, %91 : vector<1x256xf32>
    %154 = arith.addf %151, %153 : vector<1x256xf32>
    %155 = vector.broadcast %19 : f32 to vector<1x256xf32>
    %156 = arith.mulf %155, %93 : vector<1x256xf32>
    %157 = arith.addf %154, %156 : vector<1x256xf32>
    %158 = vector.broadcast %20 : f32 to vector<1x256xf32>
    %159 = arith.mulf %158, %87 : vector<1x256xf32>
    %160 = arith.addf %119, %159 : vector<1x256xf32>
    %161 = vector.broadcast %21 : f32 to vector<1x256xf32>
    %162 = arith.mulf %161, %89 : vector<1x256xf32>
    %163 = arith.addf %160, %162 : vector<1x256xf32>
    %164 = vector.broadcast %22 : f32 to vector<1x256xf32>
    %165 = arith.mulf %164, %91 : vector<1x256xf32>
    %166 = arith.addf %163, %165 : vector<1x256xf32>
    %167 = vector.broadcast %23 : f32 to vector<1x256xf32>
    %168 = arith.mulf %167, %93 : vector<1x256xf32>
    %169 = arith.addf %166, %168 : vector<1x256xf32>
    %170 = vector.broadcast %24 : f32 to vector<1x256xf32>
    %171 = arith.mulf %170, %87 : vector<1x256xf32>
    %172 = arith.addf %132, %171 : vector<1x256xf32>
    %173 = vector.broadcast %25 : f32 to vector<1x256xf32>
    %174 = arith.mulf %173, %89 : vector<1x256xf32>
    %175 = arith.addf %172, %174 : vector<1x256xf32>
    %176 = vector.broadcast %26 : f32 to vector<1x256xf32>
    %177 = arith.mulf %176, %91 : vector<1x256xf32>
    %178 = arith.addf %175, %177 : vector<1x256xf32>
    %179 = vector.broadcast %27 : f32 to vector<1x256xf32>
    %180 = arith.mulf %179, %93 : vector<1x256xf32>
    %181 = arith.addf %178, %180 : vector<1x256xf32>
    %182 = vector.broadcast %28 : f32 to vector<1x256xf32>
    %183 = arith.mulf %182, %87 : vector<1x256xf32>
    %184 = arith.addf %145, %183 : vector<1x256xf32>
    %185 = vector.broadcast %29 : f32 to vector<1x256xf32>
    %186 = arith.mulf %185, %89 : vector<1x256xf32>
    %187 = arith.addf %184, %186 : vector<1x256xf32>
    %188 = vector.broadcast %30 : f32 to vector<1x256xf32>
    %189 = arith.mulf %188, %91 : vector<1x256xf32>
    %190 = arith.addf %187, %189 : vector<1x256xf32>
    %191 = vector.broadcast %31 : f32 to vector<1x256xf32>
    %192 = arith.mulf %191, %93 : vector<1x256xf32>
    %193 = arith.addf %190, %192 : vector<1x256xf32>
    %194 = arith.maximumf %157, %169 : vector<1x256xf32>
    %195 = arith.maximumf %194, %181 : vector<1x256xf32>
    %196 = arith.maximumf %195, %193 : vector<1x256xf32>
    %197 = arith.subf %157, %196 : vector<1x256xf32>
    %198 = math.exp %197 : vector<1x256xf32>
    %199 = arith.subf %169, %196 : vector<1x256xf32>
    %200 = math.exp %199 : vector<1x256xf32>
    %201 = arith.subf %181, %196 : vector<1x256xf32>
    %202 = math.exp %201 : vector<1x256xf32>
    %203 = arith.subf %193, %196 : vector<1x256xf32>
    %204 = math.exp %203 : vector<1x256xf32>
    %205 = arith.addf %198, %200 : vector<1x256xf32>
    %206 = arith.addf %205, %202 : vector<1x256xf32>
    %207 = arith.addf %206, %204 : vector<1x256xf32>
    %cst_89 = arith.constant 1.000000e+00 : f32
    %208 = vector.broadcast %cst_89 : f32 to vector<1x256xf32>
    %209 = arith.divf %208, %207 : vector<1x256xf32>
    %210 = arith.mulf %198, %209 : vector<1x256xf32>
    %211 = arith.subf %210, %45 : vector<1x256xf32>
    %212 = arith.mulf %200, %209 : vector<1x256xf32>
    %213 = arith.subf %212, %47 : vector<1x256xf32>
    %214 = arith.mulf %202, %209 : vector<1x256xf32>
    %215 = arith.subf %214, %49 : vector<1x256xf32>
    %216 = arith.mulf %204, %209 : vector<1x256xf32>
    %217 = arith.subf %216, %51 : vector<1x256xf32>
    %218 = vector.broadcast %0 : f32 to vector<1x256xf32>
    %219 = arith.mulf %218, %211 : vector<1x256xf32>
    %220 = vector.broadcast %4 : f32 to vector<1x256xf32>
    %221 = arith.mulf %220, %213 : vector<1x256xf32>
    %222 = arith.addf %219, %221 : vector<1x256xf32>
    %223 = vector.broadcast %8 : f32 to vector<1x256xf32>
    %224 = arith.mulf %223, %215 : vector<1x256xf32>
    %225 = arith.addf %222, %224 : vector<1x256xf32>
    %226 = vector.broadcast %12 : f32 to vector<1x256xf32>
    %227 = arith.mulf %226, %217 : vector<1x256xf32>
    %228 = arith.addf %225, %227 : vector<1x256xf32>
    %229 = vector.broadcast %1 : f32 to vector<1x256xf32>
    %230 = arith.mulf %229, %211 : vector<1x256xf32>
    %231 = vector.broadcast %5 : f32 to vector<1x256xf32>
    %232 = arith.mulf %231, %213 : vector<1x256xf32>
    %233 = arith.addf %230, %232 : vector<1x256xf32>
    %234 = vector.broadcast %9 : f32 to vector<1x256xf32>
    %235 = arith.mulf %234, %215 : vector<1x256xf32>
    %236 = arith.addf %233, %235 : vector<1x256xf32>
    %237 = vector.broadcast %13 : f32 to vector<1x256xf32>
    %238 = arith.mulf %237, %217 : vector<1x256xf32>
    %239 = arith.addf %236, %238 : vector<1x256xf32>
    %240 = vector.broadcast %2 : f32 to vector<1x256xf32>
    %241 = arith.mulf %240, %211 : vector<1x256xf32>
    %242 = vector.broadcast %6 : f32 to vector<1x256xf32>
    %243 = arith.mulf %242, %213 : vector<1x256xf32>
    %244 = arith.addf %241, %243 : vector<1x256xf32>
    %245 = vector.broadcast %10 : f32 to vector<1x256xf32>
    %246 = arith.mulf %245, %215 : vector<1x256xf32>
    %247 = arith.addf %244, %246 : vector<1x256xf32>
    %248 = vector.broadcast %14 : f32 to vector<1x256xf32>
    %249 = arith.mulf %248, %217 : vector<1x256xf32>
    %250 = arith.addf %247, %249 : vector<1x256xf32>
    %251 = vector.broadcast %3 : f32 to vector<1x256xf32>
    %252 = arith.mulf %251, %211 : vector<1x256xf32>
    %253 = vector.broadcast %7 : f32 to vector<1x256xf32>
    %254 = arith.mulf %253, %213 : vector<1x256xf32>
    %255 = arith.addf %252, %254 : vector<1x256xf32>
    %256 = vector.broadcast %11 : f32 to vector<1x256xf32>
    %257 = arith.mulf %256, %215 : vector<1x256xf32>
    %258 = arith.addf %255, %257 : vector<1x256xf32>
    %259 = vector.broadcast %15 : f32 to vector<1x256xf32>
    %260 = arith.mulf %259, %217 : vector<1x256xf32>
    %261 = arith.addf %258, %260 : vector<1x256xf32>
    %262 = arith.mulf %228, %228 : vector<1x256xf32>
    %263 = vector.shape_cast %262 : vector<1x256xf32> to vector<1x1x256xf32>
    %cst_90 = arith.constant dense<0.000000e+00> : vector<1xf32>
    %264 = vector.multi_reduction <add>, %263, %cst_90 [1, 2] : vector<1x1x256xf32> to vector<1xf32>
    %265 = vector.shape_cast %264 : vector<1xf32> to vector<1x1x1xf32>
    %266 = vector.extract %265[0, 0, 0] : f32 from vector<1x1x1xf32>
    %267 = arith.mulf %239, %239 : vector<1x256xf32>
    %268 = vector.shape_cast %267 : vector<1x256xf32> to vector<1x1x256xf32>
    %cst_91 = arith.constant dense<0.000000e+00> : vector<1xf32>
    %269 = vector.multi_reduction <add>, %268, %cst_91 [1, 2] : vector<1x1x256xf32> to vector<1xf32>
    %270 = vector.shape_cast %269 : vector<1xf32> to vector<1x1x1xf32>
    %271 = vector.extract %270[0, 0, 0] : f32 from vector<1x1x1xf32>
    %272 = arith.addf %266, %271 : f32
    %273 = arith.mulf %250, %250 : vector<1x256xf32>
    %274 = vector.shape_cast %273 : vector<1x256xf32> to vector<1x1x256xf32>
    %cst_92 = arith.constant dense<0.000000e+00> : vector<1xf32>
    %275 = vector.multi_reduction <add>, %274, %cst_92 [1, 2] : vector<1x1x256xf32> to vector<1xf32>
    %276 = vector.shape_cast %275 : vector<1xf32> to vector<1x1x1xf32>
    %277 = vector.extract %276[0, 0, 0] : f32 from vector<1x1x1xf32>
    %278 = arith.addf %272, %277 : f32
    %279 = arith.mulf %261, %261 : vector<1x256xf32>
    %280 = vector.shape_cast %279 : vector<1x256xf32> to vector<1x1x256xf32>
    %cst_93 = arith.constant dense<0.000000e+00> : vector<1xf32>
    %281 = vector.multi_reduction <add>, %280, %cst_93 [1, 2] : vector<1x1x256xf32> to vector<1xf32>
    %282 = vector.shape_cast %281 : vector<1xf32> to vector<1x1x1xf32>
    %283 = vector.extract %282[0, 0, 0] : f32 from vector<1x1x1xf32>
    %284 = arith.addf %278, %283 : f32
    %285 = math.sqrt %284 : f32
    %cst_94 = arith.constant 0.01953125 : f32
    %286 = arith.mulf %cst_94, %285 : f32
    %cst_95 = arith.constant 9.99999993E-9 : f32
    %287 = arith.addf %286, %cst_95 : f32
    %cst_96 = arith.constant 0.01953125 : f32
    %288 = arith.divf %cst_96, %287 : f32
    %289 = vector.broadcast %288 : f32 to vector<1x256xf32>
    %290 = arith.mulf %228, %289 : vector<1x256xf32>
    %291 = vector.broadcast %288 : f32 to vector<1x256xf32>
    %292 = arith.mulf %239, %291 : vector<1x256xf32>
    %293 = vector.broadcast %288 : f32 to vector<1x256xf32>
    %294 = arith.mulf %250, %293 : vector<1x256xf32>
    %295 = vector.broadcast %288 : f32 to vector<1x256xf32>
    %296 = arith.mulf %261, %295 : vector<1x256xf32>
    %297 = vector.broadcast %16 : f32 to vector<1x256xf32>
    %298 = arith.mulf %297, %290 : vector<1x256xf32>
    %299 = arith.addf %106, %298 : vector<1x256xf32>
    %300 = vector.broadcast %17 : f32 to vector<1x256xf32>
    %301 = arith.mulf %300, %292 : vector<1x256xf32>
    %302 = arith.addf %299, %301 : vector<1x256xf32>
    %303 = vector.broadcast %18 : f32 to vector<1x256xf32>
    %304 = arith.mulf %303, %294 : vector<1x256xf32>
    %305 = arith.addf %302, %304 : vector<1x256xf32>
    %306 = vector.broadcast %19 : f32 to vector<1x256xf32>
    %307 = arith.mulf %306, %296 : vector<1x256xf32>
    %308 = arith.addf %305, %307 : vector<1x256xf32>
    %309 = vector.broadcast %20 : f32 to vector<1x256xf32>
    %310 = arith.mulf %309, %290 : vector<1x256xf32>
    %311 = arith.addf %119, %310 : vector<1x256xf32>
    %312 = vector.broadcast %21 : f32 to vector<1x256xf32>
    %313 = arith.mulf %312, %292 : vector<1x256xf32>
    %314 = arith.addf %311, %313 : vector<1x256xf32>
    %315 = vector.broadcast %22 : f32 to vector<1x256xf32>
    %316 = arith.mulf %315, %294 : vector<1x256xf32>
    %317 = arith.addf %314, %316 : vector<1x256xf32>
    %318 = vector.broadcast %23 : f32 to vector<1x256xf32>
    %319 = arith.mulf %318, %296 : vector<1x256xf32>
    %320 = arith.addf %317, %319 : vector<1x256xf32>
    %321 = vector.broadcast %24 : f32 to vector<1x256xf32>
    %322 = arith.mulf %321, %290 : vector<1x256xf32>
    %323 = arith.addf %132, %322 : vector<1x256xf32>
    %324 = vector.broadcast %25 : f32 to vector<1x256xf32>
    %325 = arith.mulf %324, %292 : vector<1x256xf32>
    %326 = arith.addf %323, %325 : vector<1x256xf32>
    %327 = vector.broadcast %26 : f32 to vector<1x256xf32>
    %328 = arith.mulf %327, %294 : vector<1x256xf32>
    %329 = arith.addf %326, %328 : vector<1x256xf32>
    %330 = vector.broadcast %27 : f32 to vector<1x256xf32>
    %331 = arith.mulf %330, %296 : vector<1x256xf32>
    %332 = arith.addf %329, %331 : vector<1x256xf32>
    %333 = vector.broadcast %28 : f32 to vector<1x256xf32>
    %334 = arith.mulf %333, %290 : vector<1x256xf32>
    %335 = arith.addf %145, %334 : vector<1x256xf32>
    %336 = vector.broadcast %29 : f32 to vector<1x256xf32>
    %337 = arith.mulf %336, %292 : vector<1x256xf32>
    %338 = arith.addf %335, %337 : vector<1x256xf32>
    %339 = vector.broadcast %30 : f32 to vector<1x256xf32>
    %340 = arith.mulf %339, %294 : vector<1x256xf32>
    %341 = arith.addf %338, %340 : vector<1x256xf32>
    %342 = vector.broadcast %31 : f32 to vector<1x256xf32>
    %343 = arith.mulf %342, %296 : vector<1x256xf32>
    %344 = arith.addf %341, %343 : vector<1x256xf32>
    %345 = arith.maximumf %308, %320 : vector<1x256xf32>
    %346 = arith.maximumf %345, %332 : vector<1x256xf32>
    %347 = arith.maximumf %346, %344 : vector<1x256xf32>
    %348 = arith.subf %308, %347 : vector<1x256xf32>
    %349 = math.exp %348 : vector<1x256xf32>
    %350 = arith.subf %320, %347 : vector<1x256xf32>
    %351 = math.exp %350 : vector<1x256xf32>
    %352 = arith.subf %332, %347 : vector<1x256xf32>
    %353 = math.exp %352 : vector<1x256xf32>
    %354 = arith.subf %344, %347 : vector<1x256xf32>
    %355 = math.exp %354 : vector<1x256xf32>
    %356 = arith.addf %349, %351 : vector<1x256xf32>
    %357 = arith.addf %356, %353 : vector<1x256xf32>
    %358 = arith.addf %357, %355 : vector<1x256xf32>
    %cst_97 = arith.constant 1.000000e+00 : f32
    %359 = vector.broadcast %cst_97 : f32 to vector<1x256xf32>
    %360 = arith.divf %359, %358 : vector<1x256xf32>
    %361 = arith.mulf %349, %360 : vector<1x256xf32>
    %362 = arith.subf %361, %45 : vector<1x256xf32>
    %363 = arith.mulf %351, %360 : vector<1x256xf32>
    %364 = arith.subf %363, %47 : vector<1x256xf32>
    %365 = arith.mulf %353, %360 : vector<1x256xf32>
    %366 = arith.subf %365, %49 : vector<1x256xf32>
    %367 = arith.mulf %355, %360 : vector<1x256xf32>
    %368 = arith.subf %367, %51 : vector<1x256xf32>
    %369 = vector.broadcast %0 : f32 to vector<1x256xf32>
    %370 = arith.mulf %369, %362 : vector<1x256xf32>
    %371 = vector.broadcast %4 : f32 to vector<1x256xf32>
    %372 = arith.mulf %371, %364 : vector<1x256xf32>
    %373 = arith.addf %370, %372 : vector<1x256xf32>
    %374 = vector.broadcast %8 : f32 to vector<1x256xf32>
    %375 = arith.mulf %374, %366 : vector<1x256xf32>
    %376 = arith.addf %373, %375 : vector<1x256xf32>
    %377 = vector.broadcast %12 : f32 to vector<1x256xf32>
    %378 = arith.mulf %377, %368 : vector<1x256xf32>
    %379 = arith.addf %376, %378 : vector<1x256xf32>
    %380 = vector.broadcast %1 : f32 to vector<1x256xf32>
    %381 = arith.mulf %380, %362 : vector<1x256xf32>
    %382 = vector.broadcast %5 : f32 to vector<1x256xf32>
    %383 = arith.mulf %382, %364 : vector<1x256xf32>
    %384 = arith.addf %381, %383 : vector<1x256xf32>
    %385 = vector.broadcast %9 : f32 to vector<1x256xf32>
    %386 = arith.mulf %385, %366 : vector<1x256xf32>
    %387 = arith.addf %384, %386 : vector<1x256xf32>
    %388 = vector.broadcast %13 : f32 to vector<1x256xf32>
    %389 = arith.mulf %388, %368 : vector<1x256xf32>
    %390 = arith.addf %387, %389 : vector<1x256xf32>
    %391 = vector.broadcast %2 : f32 to vector<1x256xf32>
    %392 = arith.mulf %391, %362 : vector<1x256xf32>
    %393 = vector.broadcast %6 : f32 to vector<1x256xf32>
    %394 = arith.mulf %393, %364 : vector<1x256xf32>
    %395 = arith.addf %392, %394 : vector<1x256xf32>
    %396 = vector.broadcast %10 : f32 to vector<1x256xf32>
    %397 = arith.mulf %396, %366 : vector<1x256xf32>
    %398 = arith.addf %395, %397 : vector<1x256xf32>
    %399 = vector.broadcast %14 : f32 to vector<1x256xf32>
    %400 = arith.mulf %399, %368 : vector<1x256xf32>
    %401 = arith.addf %398, %400 : vector<1x256xf32>
    %402 = vector.broadcast %3 : f32 to vector<1x256xf32>
    %403 = arith.mulf %402, %362 : vector<1x256xf32>
    %404 = vector.broadcast %7 : f32 to vector<1x256xf32>
    %405 = arith.mulf %404, %364 : vector<1x256xf32>
    %406 = arith.addf %403, %405 : vector<1x256xf32>
    %407 = vector.broadcast %11 : f32 to vector<1x256xf32>
    %408 = arith.mulf %407, %366 : vector<1x256xf32>
    %409 = arith.addf %406, %408 : vector<1x256xf32>
    %410 = vector.broadcast %15 : f32 to vector<1x256xf32>
    %411 = arith.mulf %410, %368 : vector<1x256xf32>
    %412 = arith.addf %409, %411 : vector<1x256xf32>
    %413 = arith.mulf %379, %379 : vector<1x256xf32>
    %414 = vector.shape_cast %413 : vector<1x256xf32> to vector<1x1x256xf32>
    %cst_98 = arith.constant dense<0.000000e+00> : vector<1xf32>
    %415 = vector.multi_reduction <add>, %414, %cst_98 [1, 2] : vector<1x1x256xf32> to vector<1xf32>
    %416 = vector.shape_cast %415 : vector<1xf32> to vector<1x1x1xf32>
    %417 = vector.extract %416[0, 0, 0] : f32 from vector<1x1x1xf32>
    %418 = arith.mulf %390, %390 : vector<1x256xf32>
    %419 = vector.shape_cast %418 : vector<1x256xf32> to vector<1x1x256xf32>
    %cst_99 = arith.constant dense<0.000000e+00> : vector<1xf32>
    %420 = vector.multi_reduction <add>, %419, %cst_99 [1, 2] : vector<1x1x256xf32> to vector<1xf32>
    %421 = vector.shape_cast %420 : vector<1xf32> to vector<1x1x1xf32>
    %422 = vector.extract %421[0, 0, 0] : f32 from vector<1x1x1xf32>
    %423 = arith.addf %417, %422 : f32
    %424 = arith.mulf %401, %401 : vector<1x256xf32>
    %425 = vector.shape_cast %424 : vector<1x256xf32> to vector<1x1x256xf32>
    %cst_100 = arith.constant dense<0.000000e+00> : vector<1xf32>
    %426 = vector.multi_reduction <add>, %425, %cst_100 [1, 2] : vector<1x1x256xf32> to vector<1xf32>
    %427 = vector.shape_cast %426 : vector<1xf32> to vector<1x1x1xf32>
    %428 = vector.extract %427[0, 0, 0] : f32 from vector<1x1x1xf32>
    %429 = arith.addf %423, %428 : f32
    %430 = arith.mulf %412, %412 : vector<1x256xf32>
    %431 = vector.shape_cast %430 : vector<1x256xf32> to vector<1x1x256xf32>
    %cst_101 = arith.constant dense<0.000000e+00> : vector<1xf32>
    %432 = vector.multi_reduction <add>, %431, %cst_101 [1, 2] : vector<1x1x256xf32> to vector<1xf32>
    %433 = vector.shape_cast %432 : vector<1xf32> to vector<1x1x1xf32>
    %434 = vector.extract %433[0, 0, 0] : f32 from vector<1x1x1xf32>
    %435 = arith.addf %429, %434 : f32
    %436 = math.sqrt %435 : f32
    %cst_102 = arith.constant 0.01953125 : f32
    %437 = arith.mulf %cst_102, %436 : f32
    %cst_103 = arith.constant 9.99999993E-9 : f32
    %438 = arith.addf %437, %cst_103 : f32
    %cst_104 = arith.constant 0.01953125 : f32
    %439 = arith.divf %cst_104, %438 : f32
    %440 = vector.broadcast %439 : f32 to vector<1x256xf32>
    %441 = arith.mulf %379, %440 : vector<1x256xf32>
    %442 = vector.broadcast %439 : f32 to vector<1x256xf32>
    %443 = arith.mulf %390, %442 : vector<1x256xf32>
    %444 = vector.broadcast %439 : f32 to vector<1x256xf32>
    %445 = arith.mulf %401, %444 : vector<1x256xf32>
    %446 = vector.broadcast %439 : f32 to vector<1x256xf32>
    %447 = arith.mulf %412, %446 : vector<1x256xf32>
    %cst_105 = arith.constant 1.000000e+00 : f32
    %448 = vector.broadcast %cst_105 : f32 to vector<1x256xf32>
    %449 = arith.mulf %448, %441 : vector<1x256xf32>
    %450 = arith.addf %37, %449 : vector<1x256xf32>
    %c0_106 = arith.constant 0 : index
    %c0_107 = arith.constant 0 : index
    %c0_108 = arith.constant 0 : index
    %451 = vector.load %arg6[%c0_106, %c0_107, %c0_108] : memref<1x4x256xf32, #tpu.memory_space<vmem>>, vector<1x1x256xf32>
    %452 = vector.shape_cast %451 : vector<1x1x256xf32> to vector<1x256xf32>
    %453 = vector.shape_cast %450 : vector<1x256xf32> to vector<1x1x256xf32>
    tpu.vector_store %arg6[%c0_106, %c0_107, %c0_108], %453 {strides = array<i32>} : memref<1x4x256xf32, #tpu.memory_space<vmem>>, vector<1x1x256xf32>,
    %cst_109 = arith.constant 1.000000e+00 : f32
    %454 = vector.broadcast %cst_109 : f32 to vector<1x256xf32>
    %455 = arith.mulf %454, %443 : vector<1x256xf32>
    %456 = arith.addf %39, %455 : vector<1x256xf32>
    %c0_110 = arith.constant 0 : index
    %c1_111 = arith.constant 1 : index
    %c0_112 = arith.constant 0 : index
    %457 = vector.load %arg6[%c0_110, %c1_111, %c0_112] : memref<1x4x256xf32, #tpu.memory_space<vmem>>, vector<1x1x256xf32>
    %458 = vector.shape_cast %457 : vector<1x1x256xf32> to vector<1x256xf32>
    %459 = vector.shape_cast %456 : vector<1x256xf32> to vector<1x1x256xf32>
    tpu.vector_store %arg6[%c0_110, %c1_111, %c0_112], %459 {strides = array<i32>} : memref<1x4x256xf32, #tpu.memory_space<vmem>>, vector<1x1x256xf32>,
    %cst_113 = arith.constant 1.000000e+00 : f32
    %460 = vector.broadcast %cst_113 : f32 to vector<1x256xf32>
    %461 = arith.mulf %460, %445 : vector<1x256xf32>
    %462 = arith.addf %41, %461 : vector<1x256xf32>
    %c0_114 = arith.constant 0 : index
    %c2_115 = arith.constant 2 : index
    %c0_116 = arith.constant 0 : index
    %463 = vector.load %arg6[%c0_114, %c2_115, %c0_116] : memref<1x4x256xf32, #tpu.memory_space<vmem>>, vector<1x1x256xf32>
    %464 = vector.shape_cast %463 : vector<1x1x256xf32> to vector<1x256xf32>
    %465 = vector.shape_cast %462 : vector<1x256xf32> to vector<1x1x256xf32>
    tpu.vector_store %arg6[%c0_114, %c2_115, %c0_116], %465 {strides = array<i32>} : memref<1x4x256xf32, #tpu.memory_space<vmem>>, vector<1x1x256xf32>,
    %cst_117 = arith.constant 1.000000e+00 : f32
    %466 = vector.broadcast %cst_117 : f32 to vector<1x256xf32>
    %467 = arith.mulf %466, %447 : vector<1x256xf32>
    %468 = arith.addf %43, %467 : vector<1x256xf32>
    %c0_118 = arith.constant 0 : index
    %c3_119 = arith.constant 3 : index
    %c0_120 = arith.constant 0 : index
    %469 = vector.load %arg6[%c0_118, %c3_119, %c0_120] : memref<1x4x256xf32, #tpu.memory_space<vmem>>, vector<1x1x256xf32>
    %470 = vector.shape_cast %469 : vector<1x1x256xf32> to vector<1x256xf32>
    %471 = vector.shape_cast %468 : vector<1x256xf32> to vector<1x1x256xf32>
    tpu.vector_store %arg6[%c0_118, %c3_119, %c0_120], %471 {strides = array<i32>} : memref<1x4x256xf32, #tpu.memory_space<vmem>>, vector<1x1x256xf32>,
    return
  }
  func.func @transform_0(%arg0: i32) -> (i32, i32) {
    %c0_i32 = arith.constant 0 : i32
    %c0_i32_0 = arith.constant 0 : i32
    %c0_i32_1 = arith.constant 0 : i32
    return %c0_i32, %c0_i32_0 : i32, i32
  }
  func.func @transform_1(%arg0: i32) -> i32 {
    %c0_i32 = arith.constant 0 : i32
    %c0_i32_0 = arith.constant 0 : i32
    return %c0_i32 : i32
  }
  func.func @transform_2(%arg0: i32) -> (i32, i32, i32) {
    %c0_i32 = arith.constant 0 : i32
    %c0_i32_0 = arith.constant 0 : i32
    %c0_i32_1 = arith.constant 0 : i32
    return %arg0, %c0_i32, %c0_i32_0 : i32, i32, i32
  }
  func.func @transform_3(%arg0: i32) -> (i32, i32, i32) {
    %c0_i32 = arith.constant 0 : i32
    %c0_i32_0 = arith.constant 0 : i32
    %c0_i32_1 = arith.constant 0 : i32
    return %arg0, %c0_i32, %c0_i32_0 : i32, i32, i32
  }
  func.func @transform_4(%arg0: i32) -> (i32, i32, i32) {
    %c0_i32 = arith.constant 0 : i32
    %c0_i32_0 = arith.constant 0 : i32
    %c0_i32_1 = arith.constant 0 : i32
    return %arg0, %c0_i32, %c0_i32_0 : i32, i32, i32
  }
  func.func @transform_5(%arg0: i32) -> (i32, i32, i32) {
    %c0_i32 = arith.constant 0 : i32
    %c0_i32_0 = arith.constant 0 : i32
    %c0_i32_1 = arith.constant 0 : i32
    return %arg0, %c0_i32, %c0_i32_0 : i32, i32, i32
  }
}

</mosaic_0001>

<llo_original>
// kernel: tpu_custom_call.1
$region0: #{tpu_custom_call.1}
  #allocation0 [shape = 'u32[]', space=smem, size = 0x4, offset = 0x4, fixed_abs, tag = 'smem constant byte address 0x4 - core index']
  #allocation1 [shape = 'u32[72,128]{1,0:T(1,128)}', space=vmem, size = 0x9000, scoped, tag = 'internal scratch']
  %s0 = inlined_call_operand.hbm [shape: f32[4,4], index: 0, kind: input, shape index: {}]
  %s1 = inlined_call_operand.hbm [shape: f32[4], index: 1, kind: input, shape index: {}]
  %s2 = inlined_call_operand.hbm [shape: f32[2,4,256], index: 2, kind: input, shape index: {}]
  %s3 = inlined_call_operand.hbm [shape: f32[2,4,256], index: 3, kind: input, shape index: {}]
  %s4 = inlined_call_operand.hbm [shape: f32[2,4,256], index: 4, kind: input, shape index: {}]
  %s5 = inlined_call_operand.hbm [shape: f32[2,4,256], index: 5, kind: output, shape index: {}]
  %s6 = sld [smem:[#allocation0]]
  $region73: #{tpu_custom_call.1} parent=0
    _
  %s8 = ssub.s32 1, %s6
  %s9 = scalar_select 0, %s8, %s6
  $region1: #{tpu_custom_call.1} parent=0
    #allocation2 [shape = 'u8[2048]{0}', space=smem, size = 0x800, scoped, tag = 'input window, operand 0, single buffered']
    #allocation3 [shape = 's32[2]{0}', space=sflag, size = 0x8, scoped, tag = 'scoped memory for tpu_custom_call.1']
    #allocation4 [shape = 's32[2]{0}', space=sflag, size = 0x8, scoped, tag = 'scoped memory for tpu_custom_call.1']
    #allocation5 [shape = 's32[2]{0}', space=sflag, size = 0x8, scoped, tag = 'scoped memory for tpu_custom_call.1']
    #allocation6 [shape = 'u8[512]{0}', space=smem, size = 0x200, scoped, tag = 'input window, operand 1, single buffered']
    #allocation7 [shape = 's32[1]{0}', space=sflag, size = 0x4, scoped, tag = 'scoped memory for tpu_custom_call.1']
    #allocation8 [shape = 'u8[8192]{0}', space=vmem, size = 0x2000, scoped, tag = 'input window, operand 2']
    #allocation9 [shape = 'u8[8192]{0}', space=vmem, size = 0x2000, scoped, tag = 'input window, operand 3']
    #allocation10 [shape = 's32[2]{0}', space=sflag, size = 0x8, scoped, tag = 'scoped memory for tpu_custom_call.1']
    #allocation11 [shape = 'u8[8192]{0}', space=vmem, size = 0x2000, scoped, tag = 'input window, operand 4']
    #allocation12 [shape = 'u8[8192]{0}', space=vmem, size = 0x2000, scoped, tag = 'output window, operand 0']
    %10 = vsyncpa [#allocation5], 0
    %11 = vsyncpa [#allocation7], 0
    %12 = vsyncpa [#allocation3], 0
    %s13 = scalar_lea.sflag [#allocation3], 1
    %14 = vsyncpa %s13, 0
    %15 = vsyncpa [#allocation10], 0
    %s16 = scalar_lea.sflag [#allocation10], 1
    %17 = vsyncpa %s16, 0
    %18 = vsyncpa [#allocation4], 0
    %s19 = scalar_lea.sflag [#allocation4], 1
    %20 = vsyncpa %s19, 0
    loop: start=0, step=1, limit=4
    $region2: #{tpu_custom_call.1} parent=1 // loop_pre_header
      _
    $region3: #{tpu_custom_call.1} parent=1 // loop_header
      %s22 = sphi 0, %s26
      %p23 = scmp.ge.s32.totalorder %s22, 4
      %s30 = sphi 0, %s30
      %s32 = sphi 0, %s30
      %s33 = sphi 0, %s32
      %s47 = sphi 0, %s33
      %s51 = sphi 0, %s51
      %s53 = sphi 0, %s51
      %s54 = sphi 0, %s53
      %s68 = sphi 0, %s54
      %s74 = sphi 0, %s76
      %s77 = sphi 0, %s74
      %s78 = sphi 0, %s77
      %s94 = sphi 0, %s78
      %s100 = sphi 0, %s102
      %s103 = sphi 0, %s100
      %s104 = sphi 0, %s103
      %s120 = sphi 0, %s104
      %s126 = sphi 0, %s128
      %s129 = sphi 0, %s126
      %s130 = sphi 0, %s129
      %s146 = sphi 0, %s130
      %s152 = sphi 0, %s154
      %s155 = sphi 0, %s152
      %s156 = sphi 0, %s155
      %s172 = sphi 0, %s156
    $region4: #{tpu_custom_call.1} parent=1 // loop_header_branch
      %25 = sbr.rel (%p23) target = $region8
    $region5: #{tpu_custom_call.1} parent=1 // loop_body
      %s27 = ssub.s32 %s22, 1
      %s28 = ssub.s32 %s22, 2
      %s29 = sadd.s32 %s22, 1
      %s31 = sadd.s32 %s30, 1
      %p34 = scmp.eq.s32.totalorder %s22, 1
      %p35 = scmp.ne.s32.totalorder %s30, %s32
      %p36 = scmp.eq.s32.totalorder %s22, 0
      %p37 = por %p35, %p36
      %p38 = scmp.ne.s32.totalorder %s30, %s32
      %p39 = scmp.eq.s32.totalorder %s27, 1
      %p40 = por %p38, %p39
      %p41 = scmp.ne.s32.totalorder %s32, %s33
      %p42 = scmp.eq.s32.totalorder %s27, 0
      %p43 = por %p41, %p42
      %p44 = scmp.ne.s32.totalorder %s32, %s33
      %p45 = scmp.eq.s32.totalorder %s28, 1
      %p46 = por %p44, %p45
      %p48 = scmp.ne.s32.totalorder %s33, %s47
      %p49 = scmp.eq.s32.totalorder %s28, 0
      %p50 = por %p48, %p49
      %s52 = sadd.s32 %s51, 1
      %p55 = scmp.eq.s32.totalorder %s22, 1
      %p56 = scmp.ne.s32.totalorder %s51, %s53
      %p57 = scmp.eq.s32.totalorder %s22, 0
      %p58 = por %p56, %p57
      %p59 = scmp.ne.s32.totalorder %s51, %s53
      %p60 = scmp.eq.s32.totalorder %s27, 1
      %p61 = por %p59, %p60
      %p62 = scmp.ne.s32.totalorder %s53, %s54
      %p63 = scmp.eq.s32.totalorder %s27, 0
      %p64 = por %p62, %p63
      %p65 = scmp.ne.s32.totalorder %s53, %s54
      %p66 = scmp.eq.s32.totalorder %s28, 1
      %p67 = por %p65, %p66
      %p69 = scmp.ne.s32.totalorder %s54, %s68
      %p70 = scmp.eq.s32.totalorder %s28, 0
      %p71 = por %p69, %p70
      %s72 = ssub.s32 %s22, %s29
      %p73 = scmp.eq.s32.totalorder %s72, 0
      %s75 = sadd.s32 %s74, 1
      %s76 = scalar_select %p73, %s74, %s75
      %p79 = pneg %p73
      %p80 = scmp.eq.s32.totalorder %s22, 1
      %p81 = por %p79, %p80
      %p82 = scmp.ne.s32.totalorder %s74, %s77
      %p83 = scmp.eq.s32.totalorder %s22, 0
      %p84 = por %p82, %p83
      %p85 = scmp.ne.s32.totalorder %s74, %s77
      %p86 = scmp.eq.s32.totalorder %s27, 1
      %p87 = por %p85, %p86
      %p88 = scmp.ne.s32.totalorder %s77, %s78
      %p89 = scmp.eq.s32.totalorder %s27, 0
      %p90 = por %p88, %p89
      %p91 = scmp.ne.s32.totalorder %s77, %s78
      %p92 = scmp.eq.s32.totalorder %s28, 1
      %p93 = por %p91, %p92
      %p95 = scmp.ne.s32.totalorder %s78, %s94
      %p96 = scmp.eq.s32.totalorder %s28, 0
      %p97 = por %p95, %p96
      %s98 = ssub.s32 %s22, %s29
      %p99 = scmp.eq.s32.totalorder %s98, 0
      %s101 = sadd.s32 %s100, 1
      %s102 = scalar_select %p99, %s100, %s101
      %p105 = pneg %p99
      %p106 = scmp.eq.s32.totalorder %s22, 1
      %p107 = por %p105, %p106
      %p108 = scmp.ne.s32.totalorder %s100, %s103
      %p109 = scmp.eq.s32.totalorder %s22, 0
      %p110 = por %p108, %p109
      %p111 = scmp.ne.s32.totalorder %s100, %s103
      %p112 = scmp.eq.s32.totalorder %s27, 1
      %p113 = por %p111, %p112
      %p114 = scmp.ne.s32.totalorder %s103, %s104
      %p115 = scmp.eq.s32.totalorder %s27, 0
      %p116 = por %p114, %p115
      %p117 = scmp.ne.s32.totalorder %s103, %s104
      %p118 = scmp.eq.s32.totalorder %s28, 1
      %p119 = por %p117, %p118
      %p121 = scmp.ne.s32.totalorder %s104, %s120
      %p122 = scmp.eq.s32.totalorder %s28, 0
      %p123 = por %p121, %p122
      %s124 = ssub.s32 %s22, %s29
      %p125 = scmp.eq.s32.totalorder %s124, 0
      %s127 = sadd.s32 %s126, 1
      %s128 = scalar_select %p125, %s126, %s127
      %p131 = pneg %p125
      %p132 = scmp.eq.s32.totalorder %s22, 1
      %p133 = por %p131, %p132
      %p134 = scmp.ne.s32.totalorder %s126, %s129
      %p135 = scmp.eq.s32.totalorder %s22, 0
      %p136 = por %p134, %p135
      %p137 = scmp.ne.s32.totalorder %s126, %s129
      %p138 = scmp.eq.s32.totalorder %s27, 1
      %p139 = por %p137, %p138
      %p140 = scmp.ne.s32.totalorder %s129, %s130
      %p141 = scmp.eq.s32.totalorder %s27, 0
      %p142 = por %p140, %p141
      %p143 = scmp.ne.s32.totalorder %s129, %s130
      %p144 = scmp.eq.s32.totalorder %s28, 1
      %p145 = por %p143, %p144
      %p147 = scmp.ne.s32.totalorder %s130, %s146
      %p148 = scmp.eq.s32.totalorder %s28, 0
      %p149 = por %p147, %p148
      %s150 = ssub.s32 %s22, %s29
      %p151 = scmp.eq.s32.totalorder %s150, 0
      %s153 = sadd.s32 %s152, 1
      %s154 = scalar_select %p151, %s152, %s153
      %p157 = pneg %p151
      %p158 = scmp.eq.s32.totalorder %s22, 1
      %p159 = por %p157, %p158
      %p160 = scmp.ne.s32.totalorder %s152, %s155
      %p161 = scmp.eq.s32.totalorder %s22, 0
      %p162 = por %p160, %p161
      %p163 = scmp.ne.s32.totalorder %s152, %s155
      %p164 = scmp.eq.s32.totalorder %s27, 1
      %p165 = por %p163, %p164
      %p166 = scmp.ne.s32.totalorder %s155, %s156
      %p167 = scmp.eq.s32.totalorder %s27, 0
      %p168 = por %p166, %p167
      %p169 = scmp.ne.s32.totalorder %s155, %s156
      %p170 = scmp.eq.s32.totalorder %s28, 1
      %p171 = por %p169, %p170
      %p173 = scmp.ne.s32.totalorder %s156, %s172
      %p174 = scmp.eq.s32.totalorder %s28, 0
      %p175 = por %p173, %p174
      %p176 = scmp.le.s32.totalorder 1, %s22
      %p177 = scmp.lt.s32.totalorder %s22, 3
      %p178 = pnand %p176, %p177
      %p179 = pneg %p178
      // Predicated region
      $region9: #{tpu_custom_call.1} parent=5 // pred_check
        _
      $region10: #{tpu_custom_call.1} parent=5 // pred_check_branch
        %181 = sbr.rel (%p178) target = $region12
      $region11: #{tpu_custom_call.1} parent=5 // pred_region
        %s182 = ssub.s32 %s22, 1
        // Predicated region
        $region13: #{tpu_custom_call.1} parent=11 // pred_check
          %p183 = pneg %p43
        $region14: #{tpu_custom_call.1} parent=11 // pred_check_branch
          %185 = sbr.rel (%p183) target = $region16
        $region15: #{tpu_custom_call.1} parent=11 // pred_region
          %187 = vsyncadd [#allocation5], 0
          %s189 = sshll.u32 %s0, 4
          %s190 = int_to_ptr.hbm [resolvable:$true] %s189
          %192 = dma.hbm_to_smem %s190, 64, [#allocation2], [#allocation5]
        $region16: #{tpu_custom_call.1} parent=11 // pred_fallthru
          _
        // Predicated region
        $region17: #{tpu_custom_call.1} parent=11 // pred_check
          %p193 = pneg %p64
        $region18: #{tpu_custom_call.1} parent=11 // pred_check_branch
          %195 = sbr.rel (%p193) target = $region20
        $region19: #{tpu_custom_call.1} parent=11 // pred_region
          %197 = vsyncadd [#allocation7], 0
          %s199 = sshll.u32 %s1, 4
          %s200 = int_to_ptr.hbm [resolvable:$true] %s199
          %202 = dma.hbm_to_smem %s200, 16, [#allocation6], [#allocation7]
        $region20: #{tpu_custom_call.1} parent=11 // pred_fallthru
          _
      $region12: #{tpu_custom_call.1} parent=5 // pred_fallthru
        _
      %p203 = scmp.lt.s32.totalorder %s22, 2
      // Predicated region
      $region21: #{tpu_custom_call.1} parent=5 // pred_check
        %p204 = pneg %p203
      $region22: #{tpu_custom_call.1} parent=5 // pred_check_branch
        %206 = sbr.rel (%p204) target = $region24
      $region23: #{tpu_custom_call.1} parent=5 // pred_region
        // Predicated region
        $region25: #{tpu_custom_call.1} parent=23 // pred_check
          %p207 = pneg %p84
        $region26: #{tpu_custom_call.1} parent=23 // pred_check_branch
          %209 = sbr.rel (%p207) target = $region28
        $region27: #{tpu_custom_call.1} parent=23 // pred_region
          %s210 = sand.u32 %s74, 1
          %s211 = scalar_lea.sflag [#allocation3], %s210
          %s212 = sand.u32 %s74, 1
          %s213 = smul.addr %s212, 8
          %s214 = scalar_lea.vmem [#allocation8], %s213
          %216 = vsyncadd %s211, 0
          %s217 = smul.addr %s22, 2
          %s218 = smul.addr %s217, 4
          %s219 = scalar_lea.hbm %s2, %s218
          %s221 = sshll.u32 %s219, 4
          %s222 = int_to_ptr.hbm [resolvable:$true] %s221
          %s223 = sshll.u32 %s214, 4
          %s224 = int_to_ptr.vmem [resolvable:$true] %s223
          %226 = dma.hbm_to_vmem [thread:$0]  %s222, 128, %s224, %s211
        $region28: #{tpu_custom_call.1} parent=23 // pred_fallthru
          _
        // Predicated region
        $region29: #{tpu_custom_call.1} parent=23 // pred_check
          %p227 = pneg %p110
        $region30: #{tpu_custom_call.1} parent=23 // pred_check_branch
          %229 = sbr.rel (%p227) target = $region32
        $region31: #{tpu_custom_call.1} parent=23 // pred_region
          %s230 = sand.u32 %s22, 1
          %s231 = scalar_lea.sflag [#allocation10], %s230
          %s232 = sand.u32 %s100, 1
          %s233 = smul.addr %s232, 8
          %s234 = scalar_lea.vmem [#allocation9], %s233
          %236 = vsyncadd %s231, 0
          %s237 = smul.addr %s22, 2
          %s238 = smul.addr %s237, 4
          %s239 = scalar_lea.hbm %s3, %s238
          %s241 = sshll.u32 %s239, 4
          %s242 = int_to_ptr.hbm [resolvable:$true] %s241
          %s243 = sshll.u32 %s234, 4
          %s244 = int_to_ptr.vmem [resolvable:$true] %s243
          %246 = dma.hbm_to_vmem [thread:$0]  %s242, 128, %s244, %s231
        $region32: #{tpu_custom_call.1} parent=23 // pred_fallthru
          _
        // Predicated region
        $region33: #{tpu_custom_call.1} parent=23 // pred_check
          %p247 = pneg %p136
        $region34: #{tpu_custom_call.1} parent=23 // pred_check_branch
          %249 = sbr.rel (%p247) target = $region36
        $region35: #{tpu_custom_call.1} parent=23 // pred_region
          %s250 = sand.u32 %s22, 1
          %s251 = scalar_lea.sflag [#allocation10], %s250
          %s252 = sand.u32 %s126, 1
          %s253 = smul.addr %s252, 8
          %s254 = scalar_lea.vmem [#allocation11], %s253
          %256 = vsyncadd %s251, 0
          %s257 = smul.addr %s22, 2
          %s258 = smul.addr %s257, 4
          %s259 = scalar_lea.hbm %s4, %s258
          %s261 = sshll.u32 %s259, 4
          %s262 = int_to_ptr.hbm [resolvable:$true] %s261
          %s263 = sshll.u32 %s254, 4
          %s264 = int_to_ptr.vmem [resolvable:$true] %s263
          %266 = dma.hbm_to_vmem [thread:$0]  %s262, 128, %s264, %s251
        $region36: #{tpu_custom_call.1} parent=23 // pred_fallthru
          _
      $region24: #{tpu_custom_call.1} parent=5 // pred_fallthru
        _
      %p267 = scmp.le.s32.totalorder 1, %s22
      %p268 = scmp.lt.s32.totalorder %s22, 3
      %p269 = pnand %p267, %p268
      %p270 = pneg %p269
      // Predicated region
      $region37: #{tpu_custom_call.1} parent=5 // pred_check
        _
      $region38: #{tpu_custom_call.1} parent=5 // pred_check_branch
        %272 = sbr.rel (%p269) target = $region40
      $region39: #{tpu_custom_call.1} parent=5 // pred_region
        %s273 = ssub.s32 %s22, 1
        // Predicated region
        $region41: #{tpu_custom_call.1} parent=39 // pred_check
          %p274 = pneg %p43
        $region42: #{tpu_custom_call.1} parent=39 // pred_check_branch
          %276 = sbr.rel (%p274) target = $region44
        $region43: #{tpu_custom_call.1} parent=39 // pred_region
          %278 = dma.done [#allocation5], 64
        $region44: #{tpu_custom_call.1} parent=39 // pred_fallthru
          _
        // Predicated region
        $region45: #{tpu_custom_call.1} parent=39 // pred_check
          %p279 = pneg %p64
        $region46: #{tpu_custom_call.1} parent=39 // pred_check_branch
          %281 = sbr.rel (%p279) target = $region48
        $region47: #{tpu_custom_call.1} parent=39 // pred_region
          %283 = dma.done [#allocation7], 16
        $region48: #{tpu_custom_call.1} parent=39 // pred_fallthru
          _
        %s284 = sand.u32 %s77, 1
        %s285 = scalar_lea.sflag [#allocation3], %s284
        %s286 = sand.u32 %s77, 1
        %s287 = smul.addr %s286, 8
        %s288 = scalar_lea.vmem [#allocation8], %s287
        // Predicated region
        $region49: #{tpu_custom_call.1} parent=39 // pred_check
          %p289 = pneg %p90
        $region50: #{tpu_custom_call.1} parent=39 // pred_check_branch
          %291 = sbr.rel (%p289) target = $region52
        $region51: #{tpu_custom_call.1} parent=39 // pred_region
          %293 = dma.done %s285, 128
        $region52: #{tpu_custom_call.1} parent=39 // pred_fallthru
          _
        %s294 = sand.u32 %s27, 1
        %s295 = scalar_lea.sflag [#allocation10], %s294
        %s296 = sand.u32 %s103, 1
        %s297 = smul.addr %s296, 8
        %s298 = scalar_lea.vmem [#allocation9], %s297
        // Predicated region
        $region53: #{tpu_custom_call.1} parent=39 // pred_check
          %p299 = pneg %p116
        $region54: #{tpu_custom_call.1} parent=39 // pred_check_branch
          %301 = sbr.rel (%p299) target = $region56
        $region55: #{tpu_custom_call.1} parent=39 // pred_region
          %303 = dma.done %s295, 128
        $region56: #{tpu_custom_call.1} parent=39 // pred_fallthru
          _
        %s304 = sand.u32 %s27, 1
        %s305 = scalar_lea.sflag [#allocation10], %s304
        %s306 = sand.u32 %s129, 1
        %s307 = smul.addr %s306, 8
        %s308 = scalar_lea.vmem [#allocation11], %s307
        // Predicated region
        $region57: #{tpu_custom_call.1} parent=39 // pred_check
          %p309 = pneg %p142
        $region58: #{tpu_custom_call.1} parent=39 // pred_check_branch
          %311 = sbr.rel (%p309) target = $region60
        $region59: #{tpu_custom_call.1} parent=39 // pred_region
          %313 = dma.done %s305, 128
        $region60: #{tpu_custom_call.1} parent=39 // pred_fallthru
          _
        %314 = sfence
        %p315 = pneg %p43
        %p316 = pneg %p40
        %p317 = pneg %p64
        %p318 = pneg %p61
        %s319 = sand.u32 %s77, 1
        %s320 = scalar_lea.sflag [#allocation3], %s319
        %s321 = sand.u32 %s77, 1
        %s322 = smul.addr %s321, 8
        %s323 = scalar_lea.vmem [#allocation8], %s322
        %p324 = pneg %p90
        %p325 = pneg %p87
        %s326 = sand.u32 %s27, 1
        %s327 = scalar_lea.sflag [#allocation10], %s326
        %s328 = sand.u32 %s103, 1
        %s329 = smul.addr %s328, 8
        %s330 = scalar_lea.vmem [#allocation9], %s329
        %p331 = pneg %p116
        %p332 = pneg %p113
        %s333 = sand.u32 %s27, 1
        %s334 = scalar_lea.sflag [#allocation10], %s333
        %s335 = sand.u32 %s129, 1
        %s336 = smul.addr %s335, 8
        %s337 = scalar_lea.vmem [#allocation11], %s336
        %p338 = pneg %p142
        %p339 = pneg %p139
        %p340 = pneg %p168
        %p341 = pneg %p165
        %s342 = sand.u32 %s155, 1
        %s343 = scalar_lea.sflag [#allocation4], %s342
        %s344 = sand.u32 %s155, 1
        %s345 = smul.addr %s344, 8
        %s346 = scalar_lea.vmem [#allocation12], %s345
        %s347 = sld [smem:[#allocation2]]
        %s348 = sld [smem:[#allocation2 + $0x1]]
        %s349 = sld [smem:[#allocation2 + $0x2]]
        %s350 = sld [smem:[#allocation2 + $0x3]]
        %s351 = sld [smem:[#allocation2 + $0x80]]
        %s352 = sld [smem:[#allocation2 + $0x81]]
        %s353 = sld [smem:[#allocation2 + $0x82]]
        %s354 = sld [smem:[#allocation2 + $0x83]]
        %s355 = sld [smem:[#allocation2 + $0x100]]
        %s356 = sld [smem:[#allocation2 + $0x101]]
        %s357 = sld [smem:[#allocation2 + $0x102]]
        %s358 = sld [smem:[#allocation2 + $0x103]]
        %s359 = sld [smem:[#allocation2 + $0x180]]
        %s360 = sld [smem:[#allocation2 + $0x181]]
        %s361 = sld [smem:[#allocation2 + $0x182]]
        %s362 = sld [smem:[#allocation2 + $0x183]]
        %s363 = smul.f32 %s347, 10.0
        %s364 = smul.f32 %s348, 10.0
        %s365 = smul.f32 %s349, 10.0
        %s366 = smul.f32 %s350, 10.0
        %s367 = smul.f32 %s351, 10.0
        %s368 = smul.f32 %s352, 10.0
        %s369 = smul.f32 %s353, 10.0
        %s370 = smul.f32 %s354, 10.0
        %s371 = smul.f32 %s355, 10.0
        %s372 = smul.f32 %s356, 10.0
        %s373 = smul.f32 %s357, 10.0
        %s374 = smul.f32 %s358, 10.0
        %s375 = smul.f32 %s359, 10.0
        %s376 = smul.f32 %s360, 10.0
        %s377 = smul.f32 %s361, 10.0
        %s378 = smul.f32 %s362, 10.0
        %s379 = sld [smem:[#allocation6]]
        %s380 = sld [smem:[#allocation6 + $0x1]]
        %s381 = sld [smem:[#allocation6 + $0x2]]
        %s382 = sld [smem:[#allocation6 + $0x3]]
        %v383 = vld [vmem:[%s288] ss:$4 sm:$0x3]
        %s384 = scalar_lea.vmem %s288, 1 [#allocation8]
        %v385 = vld [vmem:[%s384] ss:$4 sm:$0x3]
        %s386 = scalar_lea.vmem %s288, 2 [#allocation8]
        %v387 = vld [vmem:[%s386] ss:$4 sm:$0x3]
        %s388 = scalar_lea.vmem %s288, 3 [#allocation8]
        %v389 = vld [vmem:[%s388] ss:$4 sm:$0x3]
        %v390 = vld [vmem:[%s308] ss:$4 sm:$0x3]
        %s391 = scalar_lea.vmem %s308, 1 [#allocation11]
        %v392 = vld [vmem:[%s391] ss:$4 sm:$0x3]
        %s393 = scalar_lea.vmem %s308, 2 [#allocation11]
        %v394 = vld [vmem:[%s393] ss:$4 sm:$0x3]
        %s395 = scalar_lea.vmem %s308, 3 [#allocation11]
        %v396 = vld [vmem:[%s395] ss:$4 sm:$0x3]
        %v397 = vld [vmem:[%s298] ss:$4 sm:$0x3]
        %s398 = scalar_lea.vmem %s298, 1 [#allocation9]
        %v399 = vld [vmem:[%s398] ss:$4 sm:$0x3]
        %s400 = scalar_lea.vmem %s298, 2 [#allocation9]
        %v401 = vld [vmem:[%s400] ss:$4 sm:$0x3]
        %s402 = scalar_lea.vmem %s298, 3 [#allocation9]
        %v403 = vld [vmem:[%s402] ss:$4 sm:$0x3]
        %v404 = vmul.f32 %v397, %v397
        %v406 = vperm.slane %v404, 0
        %v407 = vperm.slane %v404, 1
        %vm410 = vcmask 1040384
        %v411 = vsel %vm410, %v406, 0.0
        %v412 = vsel %vm410, %v407, 0.0
        %v413 = vadd.f32 %v411, %v412
        %414 = vadd.xlane.f32.xlu0 %v413
        %v415 = vpop.xlane.xlu0 %414
        %v416 = vrot.slane %v415, 4
        %v417 = vadd.f32 %v415, %v416
        %v418 = vrot.slane %v417, 2
        %v419 = vadd.f32 %v417, %v418
        %v420 = vrot.slane %v419, 1
        %v421 = vadd.f32 %v419, %v420
        %s422 = vtos %v421
        %v423 = vmul.f32 %v399, %v399
        %v425 = vperm.slane %v423, 0
        %v426 = vperm.slane %v423, 1
        %v429 = vsel %vm410, %v425, 0.0
        %v430 = vsel %vm410, %v426, 0.0
        %v431 = vadd.f32 %v429, %v430
        %432 = vadd.xlane.f32.xlu0 %v431
        %v433 = vpop.xlane.xlu0 %432
        %v434 = vrot.slane %v433, 4
        %v435 = vadd.f32 %v433, %v434
        %v436 = vrot.slane %v435, 2
        %v437 = vadd.f32 %v435, %v436
        %v438 = vrot.slane %v437, 1
        %v439 = vadd.f32 %v437, %v438
        %s440 = vtos %v439
        %s441 = sadd.f32 %s422, %s440
        %v442 = vmul.f32 %v401, %v401
        %v444 = vperm.slane %v442, 0
        %v445 = vperm.slane %v442, 1
        %v448 = vsel %vm410, %v444, 0.0
        %v449 = vsel %vm410, %v445, 0.0
        %v450 = vadd.f32 %v448, %v449
        %451 = vadd.xlane.f32.xlu0 %v450
        %v452 = vpop.xlane.xlu0 %451
        %v453 = vrot.slane %v452, 4
        %v454 = vadd.f32 %v452, %v453
        %v455 = vrot.slane %v454, 2
        %v456 = vadd.f32 %v454, %v455
        %v457 = vrot.slane %v456, 1
        %v458 = vadd.f32 %v456, %v457
        %s459 = vtos %v458
        %s460 = sadd.f32 %s441, %s459
        %v461 = vmul.f32 %v403, %v403
        %v463 = vperm.slane %v461, 0
        %v464 = vperm.slane %v461, 1
        %v467 = vsel %vm410, %v463, 0.0
        %v468 = vsel %vm410, %v464, 0.0
        %v469 = vadd.f32 %v467, %v468
        %470 = vadd.xlane.f32.xlu0 %v469
        %v471 = vpop.xlane.xlu0 %470
        %v472 = vrot.slane %v471, 4
        %v473 = vadd.f32 %v471, %v472
        %v474 = vrot.slane %v473, 2
        %v475 = vadd.f32 %v473, %v474
        %v476 = vrot.slane %v475, 1
        %v477 = vadd.f32 %v475, %v476
        %s478 = vtos %v477
        %s479 = sadd.f32 %s460, %s478
        %v480 = vstv %s479
        %v481 = vrsqrt.pop %v480
        %v482 = vmul.f32 %v481, %v480
        %v483 = vmul.f32 %v482, %v481
        %v484 = vmul.f32 0.5, %v483
        %v485 = vsub.f32 1.5, %v484
        %v486 = vmul.f32 %v481, %v485
        %v487 = vmul.f32 %v480, %v486
        %vm488 = vcmp.eq.f32.partialorder %v480, inf
        %v489 = vsel %vm488, %v480, %v487
        %vm490 = vcmp.eq.f32.partialorder %v480, 0.0
        %v491 = vand.u32 %v480, 2147483648
        %v492 = vsel %vm490, %v491, %v489
        %s493 = vtos %v492
        %s494 = sadd.f32 %s493, 1e-08
        %v495 = vstv %s494
        %v496 = vrcp.pop %v495
        %v497 = vmul.f32 %v495, %v496
        %v498 = vsub.f32 1.0, %v497
        %v499 = vmul.f32 %v496, %v498
        %v500 = vadd.f32 %v496, %v499
        %vm501 = vweird.f32 %v495
        %vm502 = vweird.f32 %v496
        %vm503 = vmor %vm501, %vm502
        %v504 = vsel %vm503, %v496, %v500
        %v505 = vand.u32 2147483647, %v495
        %vm506 = vcmp.eq.f32.partialorder %v505, 8.507059e+37
        %v507 = vand.u32 %v495, 2147483648
        %v508 = vor.u32 1.1754944e-38, %v507
        %v509 = vsel %vm506, %v508, %v504
        %s510 = vtos %v509
        %v511 = vstv %s510
        %v512 = vmul.f32 %v397, %v511
        %v513 = vmul.f32 %v399, %v511
        %v514 = vmul.f32 %v401, %v511
        %v515 = vmul.f32 %v403, %v511
        %v516 = vstv %s347
        %v517 = vmul.f32 %v516, %v383
        %v518 = vstv %s379
        %v519 = vadd.f32 %v517, %v518
        %v520 = vstv %s348
        %v521 = vmul.f32 %v520, %v385
        %v522 = vadd.f32 %v519, %v521
        %v523 = vstv %s349
        %v524 = vmul.f32 %v523, %v387
        %v525 = vadd.f32 %v522, %v524
        %v526 = vstv %s350
        %v527 = vmul.f32 %v526, %v389
        %v528 = vadd.f32 %v525, %v527
        %v529 = vstv %s351
        %v530 = vmul.f32 %v529, %v383
        %v531 = vstv %s380
        %v532 = vadd.f32 %v530, %v531
        %v533 = vstv %s352
        %v534 = vmul.f32 %v533, %v385
        %v535 = vadd.f32 %v532, %v534
        %v536 = vstv %s353
        %v537 = vmul.f32 %v536, %v387
        %v538 = vadd.f32 %v535, %v537
        %v539 = vstv %s354
        %v540 = vmul.f32 %v539, %v389
        %v541 = vadd.f32 %v538, %v540
        %v542 = vstv %s355
        %v543 = vmul.f32 %v542, %v383
        %v544 = vstv %s381
        %v545 = vadd.f32 %v543, %v544
        %v546 = vstv %s356
        %v547 = vmul.f32 %v546, %v385
        %v548 = vadd.f32 %v545, %v547
        %v549 = vstv %s357
        %v550 = vmul.f32 %v549, %v387
        %v551 = vadd.f32 %v548, %v550
        %v552 = vstv %s358
        %v553 = vmul.f32 %v552, %v389
        %v554 = vadd.f32 %v551, %v553
        %v555 = vstv %s359
        %v556 = vmul.f32 %v555, %v383
        %v557 = vstv %s382
        %v558 = vadd.f32 %v556, %v557
        %v559 = vstv %s360
        %v560 = vmul.f32 %v559, %v385
        %v561 = vadd.f32 %v558, %v560
        %v562 = vstv %s361
        %v563 = vmul.f32 %v562, %v387
        %v564 = vadd.f32 %v561, %v563
        %v565 = vstv %s362
        %v566 = vmul.f32 %v565, %v389
        %v567 = vadd.f32 %v564, %v566
        %v568 = vstv %s363
        %v569 = vmul.f32 %v568, %v512
        %v570 = vadd.f32 %v528, %v569
        %v571 = vstv %s364
        %v572 = vmul.f32 %v571, %v513
        %v573 = vadd.f32 %v570, %v572
        %v574 = vstv %s365
        %v575 = vmul.f32 %v574, %v514
        %v576 = vadd.f32 %v573, %v575
        %v577 = vstv %s366
        %v578 = vmul.f32 %v577, %v515
        %v579 = vadd.f32 %v576, %v578
        %v580 = vstv %s367
        %v581 = vmul.f32 %v580, %v512
        %v582 = vadd.f32 %v541, %v581
        %v583 = vstv %s368
        %v584 = vmul.f32 %v583, %v513
        %v585 = vadd.f32 %v582, %v584
        %v586 = vstv %s369
        %v587 = vmul.f32 %v586, %v514
        %v588 = vadd.f32 %v585, %v587
        %v589 = vstv %s370
        %v590 = vmul.f32 %v589, %v515
        %v591 = vadd.f32 %v588, %v590
        %v592 = vstv %s371
        %v593 = vmul.f32 %v592, %v512
        %v594 = vadd.f32 %v554, %v593
        %v595 = vstv %s372
        %v596 = vmul.f32 %v595, %v513
        %v597 = vadd.f32 %v594, %v596
        %v598 = vstv %s373
        %v599 = vmul.f32 %v598, %v514
        %v600 = vadd.f32 %v597, %v599
        %v601 = vstv %s374
        %v602 = vmul.f32 %v601, %v515
        %v603 = vadd.f32 %v600, %v602
        %v604 = vstv %s375
        %v605 = vmul.f32 %v604, %v512
        %v606 = vadd.f32 %v567, %v605
        %v607 = vstv %s376
        %v608 = vmul.f32 %v607, %v513
        %v609 = vadd.f32 %v606, %v608
        %v610 = vstv %s377
        %v611 = vmul.f32 %v610, %v514
        %v612 = vadd.f32 %v609, %v611
        %v613 = vstv %s378
        %v614 = vmul.f32 %v613, %v515
        %v615 = vadd.f32 %v612, %v614
        %v616 = vmax.f32 %v579, %v591
        %v617 = vmax.f32 %v616, %v603
        %v618 = vmax.f32 %v617, %v615
        %v619 = vsub.f32 %v579, %v618
        %v620 = vmul.f32 %v619, 1.442695
        %v621 = vpow.pop %v620
        %v622 = vsub.f32 %v591, %v618
        %v623 = vmul.f32 %v622, 1.442695
        %v624 = vpow.pop %v623
        %v625 = vsub.f32 %v603, %v618
        %v626 = vmul.f32 %v625, 1.442695
        %v627 = vpow.pop %v626
        %v628 = vsub.f32 %v615, %v618
        %v629 = vmul.f32 %v628, 1.442695
        %v630 = vpow.pop %v629
        %v631 = vadd.f32 %v621, %v624
        %v632 = vadd.f32 %v631, %v627
        %v633 = vadd.f32 %v632, %v630
        %v634 = vrcp.pop %v633
        %v635 = vmul.f32 %v633, %v634
        %v636 = vsub.f32 1.0, %v635
        %v637 = vmul.f32 %v634, %v636
        %v638 = vadd.f32 %v634, %v637
        %vm639 = vweird.f32 %v633
        %vm640 = vweird.f32 %v634
        %vm641 = vmor %vm639, %vm640
        %v642 = vsel %vm641, %v634, %v638
        %v643 = vand.u32 2147483647, %v633
        %vm644 = vcmp.eq.f32.partialorder %v643, 8.507059e+37
        %v645 = vand.u32 %v633, 2147483648
        %v646 = vor.u32 1.1754944e-38, %v645
        %v647 = vsel %vm644, %v646, %v642
        %v648 = vmul.f32 1.0, %v647
        %v649 = vmul.f32 %v621, %v648
        %v650 = vsub.f32 %v649, %v390
        %v651 = vmul.f32 %v624, %v648
        %v652 = vsub.f32 %v651, %v392
        %v653 = vmul.f32 %v627, %v648
        %v654 = vsub.f32 %v653, %v394
        %v655 = vmul.f32 %v630, %v648
        %v656 = vsub.f32 %v655, %v396
        %v657 = vmul.f32 %v516, %v650
        %v658 = vmul.f32 %v529, %v652
        %v659 = vadd.f32 %v657, %v658
        %v660 = vmul.f32 %v542, %v654
        %v661 = vadd.f32 %v659, %v660
        %v662 = vmul.f32 %v555, %v656
        %v663 = vadd.f32 %v661, %v662
        %v664 = vmul.f32 %v520, %v650
        %v665 = vmul.f32 %v533, %v652
        %v666 = vadd.f32 %v664, %v665
        %v667 = vmul.f32 %v546, %v654
        %v668 = vadd.f32 %v666, %v667
        %v669 = vmul.f32 %v559, %v656
        %v670 = vadd.f32 %v668, %v669
        %v671 = vmul.f32 %v523, %v650
        %v672 = vmul.f32 %v536, %v652
        %v673 = vadd.f32 %v671, %v672
        %v674 = vmul.f32 %v549, %v654
        %v675 = vadd.f32 %v673, %v674
        %v676 = vmul.f32 %v562, %v656
        %v677 = vadd.f32 %v675, %v676
        %v678 = vmul.f32 %v526, %v650
        %v679 = vmul.f32 %v539, %v652
        %v680 = vadd.f32 %v678, %v679
        %v681 = vmul.f32 %v552, %v654
        %v682 = vadd.f32 %v680, %v681
        %v683 = vmul.f32 %v565, %v656
        %v684 = vadd.f32 %v682, %v683
        %v685 = vmul.f32 %v663, %v663
        %v687 = vperm.slane %v685, 0
        %v688 = vperm.slane %v685, 1
        %v691 = vsel %vm410, %v687, 0.0
        %v692 = vsel %vm410, %v688, 0.0
        %v693 = vadd.f32 %v691, %v692
        %694 = vadd.xlane.f32.xlu0 %v693
        %v695 = vpop.xlane.xlu0 %694
        %v696 = vrot.slane %v695, 4
        %v697 = vadd.f32 %v695, %v696
        %v698 = vrot.slane %v697, 2
        %v699 = vadd.f32 %v697, %v698
        %v700 = vrot.slane %v699, 1
        %v701 = vadd.f32 %v699, %v700
        %s702 = vtos %v701
        %v703 = vmul.f32 %v670, %v670
        %v705 = vperm.slane %v703, 0
        %v706 = vperm.slane %v703, 1
        %v709 = vsel %vm410, %v705, 0.0
        %v710 = vsel %vm410, %v706, 0.0
        %v711 = vadd.f32 %v709, %v710
        %712 = vadd.xlane.f32.xlu0 %v711
        %v713 = vpop.xlane.xlu0 %712
        %v714 = vrot.slane %v713, 4
        %v715 = vadd.f32 %v713, %v714
        %v716 = vrot.slane %v715, 2
        %v717 = vadd.f32 %v715, %v716
        %v718 = vrot.slane %v717, 1
        %v719 = vadd.f32 %v717, %v718
        %s720 = vtos %v719
        %s721 = sadd.f32 %s702, %s720
        %v722 = vmul.f32 %v677, %v677
        %v724 = vperm.slane %v722, 0
        %v725 = vperm.slane %v722, 1
        %v728 = vsel %vm410, %v724, 0.0
        %v729 = vsel %vm410, %v725, 0.0
        %v730 = vadd.f32 %v728, %v729
        %731 = vadd.xlane.f32.xlu0 %v730
        %v732 = vpop.xlane.xlu0 %731
        %v733 = vrot.slane %v732, 4
        %v734 = vadd.f32 %v732, %v733
        %v735 = vrot.slane %v734, 2
        %v736 = vadd.f32 %v734, %v735
        %v737 = vrot.slane %v736, 1
        %v738 = vadd.f32 %v736, %v737
        %s739 = vtos %v738
        %s740 = sadd.f32 %s721, %s739
        %v741 = vmul.f32 %v684, %v684
        %v743 = vperm.slane %v741, 0
        %v744 = vperm.slane %v741, 1
        %v747 = vsel %vm410, %v743, 0.0
        %v748 = vsel %vm410, %v744, 0.0
        %v749 = vadd.f32 %v747, %v748
        %750 = vadd.xlane.f32.xlu0 %v749
        %v751 = vpop.xlane.xlu0 %750
        %v752 = vrot.slane %v751, 4
        %v753 = vadd.f32 %v751, %v752
        %v754 = vrot.slane %v753, 2
        %v755 = vadd.f32 %v753, %v754
        %v756 = vrot.slane %v755, 1
        %v757 = vadd.f32 %v755, %v756
        %s758 = vtos %v757
        %s759 = sadd.f32 %s740, %s758
        %v760 = vstv %s759
        %v761 = vrsqrt.pop %v760
        %v762 = vmul.f32 %v761, %v760
        %v763 = vmul.f32 %v762, %v761
        %v764 = vmul.f32 0.5, %v763
        %v765 = vsub.f32 1.5, %v764
        %v766 = vmul.f32 %v761, %v765
        %v767 = vmul.f32 %v760, %v766
        %vm768 = vcmp.eq.f32.partialorder %v760, inf
        %v769 = vsel %vm768, %v760, %v767
        %vm770 = vcmp.eq.f32.partialorder %v760, 0.0
        %v771 = vand.u32 %v760, 2147483648
        %v772 = vsel %vm770, %v771, %v769
        %s773 = vtos %v772
        %s774 = smul.f32 %s773, 0.01953125
        %s775 = sadd.f32 %s774, 1e-08
        %v776 = vstv %s775
        %v777 = vrcp.pop %v776
        %v778 = vmul.f32 %v776, %v777
        %v779 = vsub.f32 1.0, %v778
        %v780 = vmul.f32 %v777, %v779
        %v781 = vadd.f32 %v777, %v780
        %vm782 = vweird.f32 %v776
        %vm783 = vweird.f32 %v777
        %vm784 = vmor %vm782, %vm783
        %v785 = vsel %vm784, %v777, %v781
        %v786 = vand.u32 2147483647, %v776
        %vm787 = vcmp.eq.f32.partialorder %v786, 8.507059e+37
        %v788 = vand.u32 %v776, 2147483648
        %v789 = vor.u32 1.1754944e-38, %v788
        %v790 = vsel %vm787, %v789, %v785
        %s791 = vtos %v790
        %s792 = smul.f32 0.01953125, %s791
        %v793 = vstv %s792
        %v794 = vmul.f32 %v663, %v793
        %v795 = vmul.f32 %v670, %v793
        %v796 = vmul.f32 %v677, %v793
        %v797 = vmul.f32 %v684, %v793
        %v798 = vmul.f32 %v568, %v794
        %v799 = vadd.f32 %v528, %v798
        %v800 = vmul.f32 %v571, %v795
        %v801 = vadd.f32 %v799, %v800
        %v802 = vmul.f32 %v574, %v796
        %v803 = vadd.f32 %v801, %v802
        %v804 = vmul.f32 %v577, %v797
        %v805 = vadd.f32 %v803, %v804
        %v806 = vmul.f32 %v580, %v794
        %v807 = vadd.f32 %v541, %v806
        %v808 = vmul.f32 %v583, %v795
        %v809 = vadd.f32 %v807, %v808
        %v810 = vmul.f32 %v586, %v796
        %v811 = vadd.f32 %v809, %v810
        %v812 = vmul.f32 %v589, %v797
        %v813 = vadd.f32 %v811, %v812
        %v814 = vmul.f32 %v592, %v794
        %v815 = vadd.f32 %v554, %v814
        %v816 = vmul.f32 %v595, %v795
        %v817 = vadd.f32 %v815, %v816
        %v818 = vmul.f32 %v598, %v796
        %v819 = vadd.f32 %v817, %v818
        %v820 = vmul.f32 %v601, %v797
        %v821 = vadd.f32 %v819, %v820
        %v822 = vmul.f32 %v604, %v794
        %v823 = vadd.f32 %v567, %v822
        %v824 = vmul.f32 %v607, %v795
        %v825 = vadd.f32 %v823, %v824
        %v826 = vmul.f32 %v610, %v796
        %v827 = vadd.f32 %v825, %v826
        %v828 = vmul.f32 %v613, %v797
        %v829 = vadd.f32 %v827, %v828
        %v830 = vmax.f32 %v805, %v813
        %v831 = vmax.f32 %v830, %v821
        %v832 = vmax.f32 %v831, %v829
        %v833 = vsub.f32 %v805, %v832
        %v834 = vmul.f32 %v833, 1.442695
        %v835 = vpow.pop %v834
        %v836 = vsub.f32 %v813, %v832
        %v837 = vmul.f32 %v836, 1.442695
        %v838 = vpow.pop %v837
        %v839 = vsub.f32 %v821, %v832
        %v840 = vmul.f32 %v839, 1.442695
        %v841 = vpow.pop %v840
        %v842 = vsub.f32 %v829, %v832
        %v843 = vmul.f32 %v842, 1.442695
        %v844 = vpow.pop %v843
        %v845 = vadd.f32 %v835, %v838
        %v846 = vadd.f32 %v845, %v841
        %v847 = vadd.f32 %v846, %v844
        %v848 = vrcp.pop %v847
        %v849 = vmul.f32 %v847, %v848
        %v850 = vsub.f32 1.0, %v849
        %v851 = vmul.f32 %v848, %v850
        %v852 = vadd.f32 %v848, %v851
        %vm853 = vweird.f32 %v847
        %vm854 = vweird.f32 %v848
        %vm855 = vmor %vm853, %vm854
        %v856 = vsel %vm855, %v848, %v852
        %v857 = vand.u32 2147483647, %v847
        %vm858 = vcmp.eq.f32.partialorder %v857, 8.507059e+37
        %v859 = vand.u32 %v847, 2147483648
        %v860 = vor.u32 1.1754944e-38, %v859
        %v861 = vsel %vm858, %v860, %v856
        %v862 = vmul.f32 1.0, %v861
        %v863 = vmul.f32 %v835, %v862
        %v864 = vsub.f32 %v863, %v390
        %v865 = vmul.f32 %v838, %v862
        %v866 = vsub.f32 %v865, %v392
        %v867 = vmul.f32 %v841, %v862
        %v868 = vsub.f32 %v867, %v394
        %v869 = vmul.f32 %v844, %v862
        %v870 = vsub.f32 %v869, %v396
        %v871 = vmul.f32 %v516, %v864
        %v872 = vmul.f32 %v529, %v866
        %v873 = vadd.f32 %v871, %v872
        %v874 = vmul.f32 %v542, %v868
        %v875 = vadd.f32 %v873, %v874
        %v876 = vmul.f32 %v555, %v870
        %v877 = vadd.f32 %v875, %v876
        %v878 = vmul.f32 %v520, %v864
        %v879 = vmul.f32 %v533, %v866
        %v880 = vadd.f32 %v878, %v879
        %v881 = vmul.f32 %v546, %v868
        %v882 = vadd.f32 %v880, %v881
        %v883 = vmul.f32 %v559, %v870
        %v884 = vadd.f32 %v882, %v883
        %v885 = vmul.f32 %v523, %v864
        %v886 = vmul.f32 %v536, %v866
        %v887 = vadd.f32 %v885, %v886
        %v888 = vmul.f32 %v549, %v868
        %v889 = vadd.f32 %v887, %v888
        %v890 = vmul.f32 %v562, %v870
        %v891 = vadd.f32 %v889, %v890
        %v892 = vmul.f32 %v526, %v864
        %v893 = vmul.f32 %v539, %v866
        %v894 = vadd.f32 %v892, %v893
        %v895 = vmul.f32 %v552, %v868
        %v896 = vadd.f32 %v894, %v895
        %v897 = vmul.f32 %v565, %v870
        %v898 = vadd.f32 %v896, %v897
        %v899 = vmul.f32 %v877, %v877
        %v901 = vperm.slane %v899, 0
        %v902 = vperm.slane %v899, 1
        %v905 = vsel %vm410, %v901, 0.0
        %v906 = vsel %vm410, %v902, 0.0
        %v907 = vadd.f32 %v905, %v906
        %908 = vadd.xlane.f32.xlu0 %v907
        %v909 = vpop.xlane.xlu0 %908
        %v910 = vrot.slane %v909, 4
        %v911 = vadd.f32 %v909, %v910
        %v912 = vrot.slane %v911, 2
        %v913 = vadd.f32 %v911, %v912
        %v914 = vrot.slane %v913, 1
        %v915 = vadd.f32 %v913, %v914
        %s916 = vtos %v915
        %v917 = vmul.f32 %v884, %v884
        %v919 = vperm.slane %v917, 0
        %v920 = vperm.slane %v917, 1
        %v923 = vsel %vm410, %v919, 0.0
        %v924 = vsel %vm410, %v920, 0.0
        %v925 = vadd.f32 %v923, %v924
        %926 = vadd.xlane.f32.xlu0 %v925
        %v927 = vpop.xlane.xlu0 %926
        %v928 = vrot.slane %v927, 4
        %v929 = vadd.f32 %v927, %v928
        %v930 = vrot.slane %v929, 2
        %v931 = vadd.f32 %v929, %v930
        %v932 = vrot.slane %v931, 1
        %v933 = vadd.f32 %v931, %v932
        %s934 = vtos %v933
        %s935 = sadd.f32 %s916, %s934
        %v936 = vmul.f32 %v891, %v891
        %v938 = vperm.slane %v936, 0
        %v939 = vperm.slane %v936, 1
        %v942 = vsel %vm410, %v938, 0.0
        %v943 = vsel %vm410, %v939, 0.0
        %v944 = vadd.f32 %v942, %v943
        %945 = vadd.xlane.f32.xlu0 %v944
        %v946 = vpop.xlane.xlu0 %945
        %v947 = vrot.slane %v946, 4
        %v948 = vadd.f32 %v946, %v947
        %v949 = vrot.slane %v948, 2
        %v950 = vadd.f32 %v948, %v949
        %v951 = vrot.slane %v950, 1
        %v952 = vadd.f32 %v950, %v951
        %s953 = vtos %v952
        %s954 = sadd.f32 %s935, %s953
        %v955 = vmul.f32 %v898, %v898
        %v957 = vperm.slane %v955, 0
        %v958 = vperm.slane %v955, 1
        %v961 = vsel %vm410, %v957, 0.0
        %v962 = vsel %vm410, %v958, 0.0
        %v963 = vadd.f32 %v961, %v962
        %964 = vadd.xlane.f32.xlu0 %v963
        %v965 = vpop.xlane.xlu0 %964
        %v966 = vrot.slane %v965, 4
        %v967 = vadd.f32 %v965, %v966
        %v968 = vrot.slane %v967, 2
        %v969 = vadd.f32 %v967, %v968
        %v970 = vrot.slane %v969, 1
        %v971 = vadd.f32 %v969, %v970
        %s972 = vtos %v971
        %s973 = sadd.f32 %s954, %s972
        %v974 = vstv %s973
        %v975 = vrsqrt.pop %v974
        %v976 = vmul.f32 %v975, %v974
        %v977 = vmul.f32 %v976, %v975
        %v978 = vmul.f32 0.5, %v977
        %v979 = vsub.f32 1.5, %v978
        %v980 = vmul.f32 %v975, %v979
        %v981 = vmul.f32 %v974, %v980
        %vm982 = vcmp.eq.f32.partialorder %v974, inf
        %v983 = vsel %vm982, %v974, %v981
        %vm984 = vcmp.eq.f32.partialorder %v974, 0.0
        %v985 = vand.u32 %v974, 2147483648
        %v986 = vsel %vm984, %v985, %v983
        %s987 = vtos %v986
        %s988 = smul.f32 %s987, 0.01953125
        %s989 = sadd.f32 %s988, 1e-08
        %v990 = vstv %s989
        %v991 = vrcp.pop %v990
        %v992 = vmul.f32 %v990, %v991
        %v993 = vsub.f32 1.0, %v992
        %v994 = vmul.f32 %v991, %v993
        %v995 = vadd.f32 %v991, %v994
        %vm996 = vweird.f32 %v990
        %vm997 = vweird.f32 %v991
        %vm998 = vmor %vm996, %vm997
        %v999 = vsel %vm998, %v991, %v995
        %v1000 = vand.u32 2147483647, %v990
        %vm1001 = vcmp.eq.f32.partialorder %v1000, 8.507059e+37
        %v1002 = vand.u32 %v990, 2147483648
        %v1003 = vor.u32 1.1754944e-38, %v1002
        %v1004 = vsel %vm1001, %v1003, %v999
        %s1005 = vtos %v1004
        %s1006 = smul.f32 0.01953125, %s1005
        %v1007 = vstv %s1006
        %v1008 = vmul.f32 %v877, %v1007
        %v1009 = vmul.f32 %v884, %v1007
        %v1010 = vmul.f32 %v891, %v1007
        %v1011 = vmul.f32 %v898, %v1007
        %v1012 = vadd.f32 %v383, %v1008
        %v1013 = vlaneseq
        %vm1014 = vcmp.ge.s32.totalorder %v1013, 0
        %vm1015 = vcmp.lt.s32.totalorder %v1013, 256
        %vm1016 = vmand %vm1014, %vm1015
        %1017 = vst.msk [vmem:[%s346] ss:$4 sm:$0x3] %vm1016, %v1012
        %v1018 = vadd.f32 %v385, %v1009
        %s1019 = scalar_lea.vmem %s346, 1 [#allocation12]
        %1020 = vst.msk [vmem:[%s1019] ss:$4 sm:$0x3] %vm1016, %v1018
        %v1021 = vadd.f32 %v387, %v1010
        %s1022 = scalar_lea.vmem %s346, 2 [#allocation12]
        %1023 = vst.msk [vmem:[%s1022] ss:$4 sm:$0x3] %vm1016, %v1021
        %v1024 = vadd.f32 %v389, %v1011
        %s1025 = scalar_lea.vmem %s346, 3 [#allocation12]
        %1026 = vst.msk [vmem:[%s1025] ss:$4 sm:$0x3] %vm1016, %v1024
        %s1027 = sand.u32 %s155, 1
        %s1028 = scalar_lea.sflag [#allocation4], %s1027
        %s1029 = sand.u32 %s155, 1
        %s1030 = smul.addr %s1029, 8
        %s1031 = scalar_lea.vmem [#allocation12], %s1030
        // Predicated region
        $region61: #{tpu_custom_call.1} parent=39 // pred_check
          %p1032 = pneg %p165
        $region62: #{tpu_custom_call.1} parent=39 // pred_check_branch
          %1034 = sbr.rel (%p1032) target = $region64
        $region63: #{tpu_custom_call.1} parent=39 // pred_region
          %1036 = vsyncadd %s1028, 0
          %s1037 = smul.addr %s27, 2
          %s1038 = smul.addr %s1037, 4
          %s1039 = scalar_lea.hbm %s5, %s1038
          %s1041 = sshll.u32 %s1031, 4
          %s1042 = int_to_ptr.vmem [resolvable:$true] %s1041
          %s1043 = sshll.u32 %s1039, 4
          %s1044 = int_to_ptr.hbm [resolvable:$true] %s1043
          %1046 = dma.vmem_to_hbm [thread:$0]  %s1042, 128, %s1044, %s1028
        $region64: #{tpu_custom_call.1} parent=39 // pred_fallthru
          _
      $region40: #{tpu_custom_call.1} parent=5 // pred_fallthru
        _
      %p1047 = scmp.le.s32.totalorder 2, %s22
      // Predicated region
      $region65: #{tpu_custom_call.1} parent=5 // pred_check
        %p1048 = pneg %p1047
      $region66: #{tpu_custom_call.1} parent=5 // pred_check_branch
        %1050 = sbr.rel (%p1048) target = $region68
      $region67: #{tpu_custom_call.1} parent=5 // pred_region
        %s1051 = ssub.s32 %s22, 2
        // Predicated region
        $region69: #{tpu_custom_call.1} parent=67 // pred_check
          %p1052 = pneg %p171
        $region70: #{tpu_custom_call.1} parent=67 // pred_check_branch
          %1054 = sbr.rel (%p1052) target = $region72
        $region71: #{tpu_custom_call.1} parent=67 // pred_region
          %s1055 = sand.u32 %s156, 1
          %s1056 = scalar_lea.sflag [#allocation4], %s1055
          %s1057 = sand.u32 %s156, 1
          %s1058 = smul.addr %s1057, 8
          %s1059 = scalar_lea.vmem [#allocation12], %s1058
          %1061 = dma.done %s1056, 128
        $region72: #{tpu_custom_call.1} parent=67 // pred_fallthru
          _
      $region68: #{tpu_custom_call.1} parent=5 // pred_fallthru
        _
    $region6: #{tpu_custom_call.1} parent=1 // loop_footer
      %s26 = sadd.s32 1, %s22
    $region7: #{tpu_custom_call.1} parent=1 // loop_footer_branch
      %21 = sbr.rel target = $region3
    $region8: #{tpu_custom_call.1} parent=1 // loop_exit
      _
    %1062 = vsyncpa [#allocation3], 1
    %s1063 = scalar_lea.sflag [#allocation3], 1
    %1064 = vsyncpa %s1063, 1
    %1065 = vsyncpa [#allocation10], 1
    %s1066 = scalar_lea.sflag [#allocation10], 1
    %1067 = vsyncpa %s1066, 1
    %1068 = vsyncpa [#allocation4], 1
    %s1069 = scalar_lea.sflag [#allocation4], 1
    %1070 = vsyncpa %s1069, 1
    %1071 = vsyncpa [#allocation5], 1
    %s1072 = scalar_lea.sflag [#allocation5], 1
    %1073 = vsyncpa %s1072, 1
    %1074 = vsyncpa [#allocation7], 1

</llo_original>
